<compile_context>
chip_gen: v7x
topology: tpu7x:2x2x1
jax: 0.10.0
libtpu: 0.0.40
codegen_flags: <defaults>
</compile_context>

<pallas_src>
import functools

import jax
import jax.numpy as jnp
from jax.experimental import pallas as pl
from jax.experimental.pallas import tpu as pltpu


def _round_up(x, m):
    return ((x + m - 1) // m) * m


# ----------------------------------------------------------------------------
# Pallas kernel: per-batch dense stride-1 conv as kh*kw accumulated MXU dots
# ----------------------------------------------------------------------------
def _reflect_conv_kernel(xf_ref, w_ref, b_ref, o_ref, *, kh, kw, wp, lq):
    # xf_ref: (1, Cin, Lx)        flattened padded image of one batch element
    # w_ref : (kh*kw, Cout, Cin)  per-tap weight matrices (resident)
    # b_ref : (Cout, 1)           bias (resident)
    # o_ref : (1, Cout, Lq)       lane-dense dense-output slab
    cout = w_ref.shape[1]
    # Bias folded into the accumulator init; lane-broadcast hoisted out of the
    # tap loop (JAX does not CSE broadcast_in_dim inside loops).
    acc = jnp.broadcast_to(b_ref[...], (cout, lq)).astype(jnp.float32)
    for dy in range(kh):              # static Python loop -> fully unrolled taps
        for dx in range(kw):
            off = dy * wp + dx        # constant lane offset of this tap
            x_t = xf_ref[0, :, pl.ds(off, lq)]     # (Cin, Lq) lane slice
            w_t = w_ref[dy * kw + dx]              # (Cout, Cin)
            acc = acc + jnp.dot(w_t, x_t, preferred_element_type=jnp.float32)
    o_ref[0] = acc.astype(o_ref.dtype)


# ----------------------------------------------------------------------------
# reflect_conv forward: ReflectionPad2d(1) + Conv2d(kernel_size, stride, pad)
# ----------------------------------------------------------------------------
def reflect_conv_forward(x, weight, bias, *, kernel_size, stride, pad):
    """x: [N, Cin, H, W] f32 (NCHW); weight: [Cout, Cin, kh, kw]; bias: [Cout]."""
    N, Cin, H, W = x.shape
    Cout, Cin_w, kh, kw = weight.shape
    assert Cin == Cin_w and kh == kernel_size and kw == kernel_size
    assert H >= 2 and W >= 2  # ReflectionPad2d(1) requirement

    # 1) ReflectionPad2d(1): jnp 'reflect' == PyTorch (edge not repeated)
    xp = jnp.pad(x, ((0, 0), (0, 0), (1, 1), (1, 1)), mode="reflect")
    # 2) Conv2d zero padding
    if pad > 0:
        xp = jnp.pad(xp, ((0, 0), (0, 0), (pad, pad), (pad, pad)))
    _, _, Hp, Wp = xp.shape

    Ho = (Hp - kh) // stride + 1
    Wo = (Wp - kw) // stride + 1
    Ho1 = Hp - kh + 1            # dense (stride-1) output rows
    Wo1 = Wp - kw + 1            # dense (stride-1) valid output cols

    Lq_valid = Ho1 * Wp                    # dense output length per image
    Lq = _round_up(Lq_valid, 128)          # lane-align the output slab
    max_off = (kh - 1) * Wp + (kw - 1)
    Lx = _round_up(max_off + Lq, 128)      # input slab incl. tap overhang

    # Flatten spatial (single copy, no kh*kw expansion) and zero-pad the tail.
    xflat = xp.reshape(N, Cin, Hp * Wp).astype(jnp.float32)
    xflat = jnp.pad(xflat, ((0, 0), (0, 0), (0, Lx - Hp * Wp)))

    # weight -> per-tap (Cout, Cin) matrices; bias -> column vector.
    w_taps = jnp.transpose(weight, (2, 3, 0, 1)).reshape(kh * kw, Cout, Cin)
    w_taps = w_taps.astype(jnp.float32)
    b_col = bias.reshape(Cout, 1).astype(jnp.float32)

    kernel = functools.partial(_reflect_conv_kernel, kh=kh, kw=kw, wp=Wp, lq=Lq)

    flops = 2 * N * Cout * Cin * kh * kw * Lq
    bytes_accessed = 4 * (N * Cin * Lx + N * Cout * Lq
                          + kh * kw * Cout * Cin + Cout)

    out_dense = pl.pallas_call(
        kernel,
        out_shape=jax.ShapeDtypeStruct((N, Cout, Lq), jnp.float32),
        grid_spec=pltpu.PrefetchScalarGridSpec(
            num_scalar_prefetch=0,
            grid=(N,),
            in_specs=[
                # one image per step; lane axis is the flattened padded image
                pl.BlockSpec((1, Cin, Lx), lambda n: (n, 0, 0)),
                # constant index_maps -> weights/bias stay resident in VMEM
                pl.BlockSpec((kh * kw, Cout, Cin), lambda n: (0, 0, 0)),
                pl.BlockSpec((Cout, 1), lambda n: (0, 0)),
            ],
            out_specs=pl.BlockSpec((1, Cout, Lq), lambda n: (n, 0, 0)),
        ),
        compiler_params=pltpu.CompilerParams(
            dimension_semantics=("parallel",),   # megacore: images shard over TCs
        ),
        cost_estimate=pl.CostEstimate(
            flops=flops, transcendentals=0, bytes_accessed=bytes_accessed),
    )(xflat, w_taps, b_col)

    # Crop: drop lane padding, drop wrap-around columns, apply stride.
    out = out_dense[:, :, :Lq_valid].reshape(N, Cout, Ho1, Wp)
    out = out[:, :, : (Ho - 1) * stride + 1 : stride,
                    : (Wo - 1) * stride + 1 : stride]
    assert out.shape == (N, Cout, Ho, Wo)
    return out


# ----------------------------------------------------------------------------
# main
# ----------------------------------------------------------------------------
if __name__ == "__main__":
    # module config (typical usage: 3x3, stride 1, conv pad 0)
    in_channels, out_channels = 4, 8
    kernel_size, stride, pad = 3, 1, 0

    key = jax.random.PRNGKey(0)
    kx, kw_key, kb_key = jax.random.split(key, 3)

    # inputs: batch=2, channels=4, spatial=16
    x = jax.random.normal(kx, (2, in_channels, 16, 16), dtype=jnp.float32)

    # deterministic parameter init (kaiming-uniform-ish bounds like nn.Conv2d)
    fan_in = in_channels * kernel_size * kernel_size
    bound = 1.0 / (fan_in ** 0.5)
    weight = jax.random.uniform(
        kw_key, (out_channels, in_channels, kernel_size, kernel_size),
        minval=-bound, maxval=bound, dtype=jnp.float32)
    bias = jax.random.uniform(
        kb_key, (out_channels,), minval=-bound, maxval=bound, dtype=jnp.float32)

    fwd = jax.jit(
        functools.partial(
            reflect_conv_forward, kernel_size=kernel_size, stride=stride, pad=pad
        )
    )
    out = jax.block_until_ready(fwd(x, weight, bias))

    # sanity check against XLA's conv (reflection pad + conv), f32-accurate ref
    xp_ref = jnp.pad(x, ((0, 0), (0, 0), (1, 1), (1, 1)), mode="reflect")
    ref = jax.lax.conv_general_dilated(
        xp_ref, weight, window_strides=(stride, stride),
        padding=[(pad, pad), (pad, pad)],
        dimension_numbers=("NCHW", "OIHW", "NCHW"),
        precision=jax.lax.Precision.HIGHEST,
    ) + bias.reshape(1, -1, 1, 1)
    assert out.shape == ref.shape == (2, out_channels, 16, 16)
    # tolerance accommodates MXU default f32 precision on TPU
    max_err = float(jnp.max(jnp.abs(out - ref)))
    assert jnp.allclose(out, ref, rtol=1e-2, atol=1e-2), max_err

    print("KERNEL_OK")
</pallas_src>

<mosaic_0001>
module attributes {stable_mosaic.version = 11 : i64} {
  func.func @_reflect_conv_kernel(%arg0: i32, %arg1: memref<1x4x512xf32, #tpu.memory_space<vmem>>, %arg2: memref<9x8x4xf32, #tpu.memory_space<vmem>>, %arg3: memref<8x1xf32, #tpu.memory_space<vmem>>, %arg4: memref<1x8x384xf32, #tpu.memory_space<vmem>>) attributes {dimension_semantics = [#tpu.dimension_semantics<parallel>], iteration_bounds = array<i64: 2>, scalar_prefetch = 0 : i64, scratch_operands = 0 : i64, tpu.core_type = #tpu.core_type<tc>, window_params = [{transform_indices = @transform_0, window_bounds = array<i64: 1, 4, 512>}, {pipeline_mode = #tpu.pipeline_mode<synchronous>, transform_indices = @transform_1, window_bounds = array<i64: 9, 8, 4>}, {pipeline_mode = #tpu.pipeline_mode<synchronous>, transform_indices = @transform_2, window_bounds = array<i64: 8, 1>}, {transform_indices = @transform_3, window_bounds = array<i64: 1, 8, 384>}]} {
    %c0 = arith.constant 0 : index
    %c0_0 = arith.constant 0 : index
    %0 = vector.load %arg3[%c0, %c0_0] : memref<8x1xf32, #tpu.memory_space<vmem>>, vector<8x1xf32>
    %1 = vector.shape_cast %0 : vector<8x1xf32> to vector<8x1xf32>
    %2 = vector.broadcast %1 : vector<8x1xf32> to vector<8x384xf32>
    %c0_1 = arith.constant 0 : index
    %c0_2 = arith.constant 0 : index
    %c0_3 = arith.constant 0 : index
    %3 = vector.load %arg1[%c0_1, %c0_2, %c0_3] : memref<1x4x512xf32, #tpu.memory_space<vmem>>, vector<1x4x384xf32>
    %4 = vector.shape_cast %3 : vector<1x4x384xf32> to vector<4x384xf32>
    %c0_4 = arith.constant 0 : index
    %c0_5 = arith.constant 0 : index
    %c0_6 = arith.constant 0 : index
    %5 = vector.load %arg2[%c0_4, %c0_5, %c0_6] : memref<9x8x4xf32, #tpu.memory_space<vmem>>, vector<1x8x4xf32>
    %6 = vector.shape_cast %5 : vector<1x8x4xf32> to vector<8x4xf32>
    %cst = arith.constant dense<0.000000e+00> : vector<8x384xf32>
    %7 = tpu.matmul %6, %4, %cst {dimension_numbers = #tpu.dot_dimension_numbers<[1], [0], [0], [1], [0, 0, 1, 1], [], []>} : vector<8x4xf32>, vector<4x384xf32>, vector<8x384xf32> -> vector<8x384xf32>
    %8 = arith.addf %2, %7 : vector<8x384xf32>
    %c0_7 = arith.constant 0 : index
    %c0_8 = arith.constant 0 : index
    %c1 = arith.constant 1 : index
    %9 = vector.load %arg1[%c0_7, %c0_8, %c1] : memref<1x4x512xf32, #tpu.memory_space<vmem>>, vector<1x4x384xf32>
    %10 = vector.shape_cast %9 : vector<1x4x384xf32> to vector<4x384xf32>
    %c1_9 = arith.constant 1 : index
    %c0_10 = arith.constant 0 : index
    %c0_11 = arith.constant 0 : index
    %11 = vector.load %arg2[%c1_9, %c0_10, %c0_11] : memref<9x8x4xf32, #tpu.memory_space<vmem>>, vector<1x8x4xf32>
    %12 = vector.shape_cast %11 : vector<1x8x4xf32> to vector<8x4xf32>
    %cst_12 = arith.constant dense<0.000000e+00> : vector<8x384xf32>
    %13 = tpu.matmul %12, %10, %cst_12 {dimension_numbers = #tpu.dot_dimension_numbers<[1], [0], [0], [1], [0, 0, 1, 1], [], []>} : vector<8x4xf32>, vector<4x384xf32>, vector<8x384xf32> -> vector<8x384xf32>
    %14 = arith.addf %8, %13 : vector<8x384xf32>
    %c0_13 = arith.constant 0 : index
    %c0_14 = arith.constant 0 : index
    %c2 = arith.constant 2 : index
    %15 = vector.load %arg1[%c0_13, %c0_14, %c2] : memref<1x4x512xf32, #tpu.memory_space<vmem>>, vector<1x4x384xf32>
    %16 = vector.shape_cast %15 : vector<1x4x384xf32> to vector<4x384xf32>
    %c2_15 = arith.constant 2 : index
    %c0_16 = arith.constant 0 : index
    %c0_17 = arith.constant 0 : index
    %17 = vector.load %arg2[%c2_15, %c0_16, %c0_17] : memref<9x8x4xf32, #tpu.memory_space<vmem>>, vector<1x8x4xf32>
    %18 = vector.shape_cast %17 : vector<1x8x4xf32> to vector<8x4xf32>
    %cst_18 = arith.constant dense<0.000000e+00> : vector<8x384xf32>
    %19 = tpu.matmul %18, %16, %cst_18 {dimension_numbers = #tpu.dot_dimension_numbers<[1], [0], [0], [1], [0, 0, 1, 1], [], []>} : vector<8x4xf32>, vector<4x384xf32>, vector<8x384xf32> -> vector<8x384xf32>
    %20 = arith.addf %14, %19 : vector<8x384xf32>
    %c0_19 = arith.constant 0 : index
    %c0_20 = arith.constant 0 : index
    %c18 = arith.constant 18 : index
    %21 = vector.load %arg1[%c0_19, %c0_20, %c18] : memref<1x4x512xf32, #tpu.memory_space<vmem>>, vector<1x4x384xf32>
    %22 = vector.shape_cast %21 : vector<1x4x384xf32> to vector<4x384xf32>
    %c3 = arith.constant 3 : index
    %c0_21 = arith.constant 0 : index
    %c0_22 = arith.constant 0 : index
    %23 = vector.load %arg2[%c3, %c0_21, %c0_22] : memref<9x8x4xf32, #tpu.memory_space<vmem>>, vector<1x8x4xf32>
    %24 = vector.shape_cast %23 : vector<1x8x4xf32> to vector<8x4xf32>
    %cst_23 = arith.constant dense<0.000000e+00> : vector<8x384xf32>
    %25 = tpu.matmul %24, %22, %cst_23 {dimension_numbers = #tpu.dot_dimension_numbers<[1], [0], [0], [1], [0, 0, 1, 1], [], []>} : vector<8x4xf32>, vector<4x384xf32>, vector<8x384xf32> -> vector<8x384xf32>
    %26 = arith.addf %20, %25 : vector<8x384xf32>
    %c0_24 = arith.constant 0 : index
    %c0_25 = arith.constant 0 : index
    %c19 = arith.constant 19 : index
    %27 = vector.load %arg1[%c0_24, %c0_25, %c19] : memref<1x4x512xf32, #tpu.memory_space<vmem>>, vector<1x4x384xf32>
    %28 = vector.shape_cast %27 : vector<1x4x384xf32> to vector<4x384xf32>
    %c4 = arith.constant 4 : index
    %c0_26 = arith.constant 0 : index
    %c0_27 = arith.constant 0 : index
    %29 = vector.load %arg2[%c4, %c0_26, %c0_27] : memref<9x8x4xf32, #tpu.memory_space<vmem>>, vector<1x8x4xf32>
    %30 = vector.shape_cast %29 : vector<1x8x4xf32> to vector<8x4xf32>
    %cst_28 = arith.constant dense<0.000000e+00> : vector<8x384xf32>
    %31 = tpu.matmul %30, %28, %cst_28 {dimension_numbers = #tpu.dot_dimension_numbers<[1], [0], [0], [1], [0, 0, 1, 1], [], []>} : vector<8x4xf32>, vector<4x384xf32>, vector<8x384xf32> -> vector<8x384xf32>
    %32 = arith.addf %26, %31 : vector<8x384xf32>
    %c0_29 = arith.constant 0 : index
    %c0_30 = arith.constant 0 : index
    %c20 = arith.constant 20 : index
    %33 = vector.load %arg1[%c0_29, %c0_30, %c20] : memref<1x4x512xf32, #tpu.memory_space<vmem>>, vector<1x4x384xf32>
    %34 = vector.shape_cast %33 : vector<1x4x384xf32> to vector<4x384xf32>
    %c5 = arith.constant 5 : index
    %c0_31 = arith.constant 0 : index
    %c0_32 = arith.constant 0 : index
    %35 = vector.load %arg2[%c5, %c0_31, %c0_32] : memref<9x8x4xf32, #tpu.memory_space<vmem>>, vector<1x8x4xf32>
    %36 = vector.shape_cast %35 : vector<1x8x4xf32> to vector<8x4xf32>
    %cst_33 = arith.constant dense<0.000000e+00> : vector<8x384xf32>
    %37 = tpu.matmul %36, %34, %cst_33 {dimension_numbers = #tpu.dot_dimension_numbers<[1], [0], [0], [1], [0, 0, 1, 1], [], []>} : vector<8x4xf32>, vector<4x384xf32>, vector<8x384xf32> -> vector<8x384xf32>
    %38 = arith.addf %32, %37 : vector<8x384xf32>
    %c0_34 = arith.constant 0 : index
    %c0_35 = arith.constant 0 : index
    %c36 = arith.constant 36 : index
    %39 = vector.load %arg1[%c0_34, %c0_35, %c36] : memref<1x4x512xf32, #tpu.memory_space<vmem>>, vector<1x4x384xf32>
    %40 = vector.shape_cast %39 : vector<1x4x384xf32> to vector<4x384xf32>
    %c6 = arith.constant 6 : index
    %c0_36 = arith.constant 0 : index
    %c0_37 = arith.constant 0 : index
    %41 = vector.load %arg2[%c6, %c0_36, %c0_37] : memref<9x8x4xf32, #tpu.memory_space<vmem>>, vector<1x8x4xf32>
    %42 = vector.shape_cast %41 : vector<1x8x4xf32> to vector<8x4xf32>
    %cst_38 = arith.constant dense<0.000000e+00> : vector<8x384xf32>
    %43 = tpu.matmul %42, %40, %cst_38 {dimension_numbers = #tpu.dot_dimension_numbers<[1], [0], [0], [1], [0, 0, 1, 1], [], []>} : vector<8x4xf32>, vector<4x384xf32>, vector<8x384xf32> -> vector<8x384xf32>
    %44 = arith.addf %38, %43 : vector<8x384xf32>
    %c0_39 = arith.constant 0 : index
    %c0_40 = arith.constant 0 : index
    %c37 = arith.constant 37 : index
    %45 = vector.load %arg1[%c0_39, %c0_40, %c37] : memref<1x4x512xf32, #tpu.memory_space<vmem>>, vector<1x4x384xf32>
    %46 = vector.shape_cast %45 : vector<1x4x384xf32> to vector<4x384xf32>
    %c7 = arith.constant 7 : index
    %c0_41 = arith.constant 0 : index
    %c0_42 = arith.constant 0 : index
    %47 = vector.load %arg2[%c7, %c0_41, %c0_42] : memref<9x8x4xf32, #tpu.memory_space<vmem>>, vector<1x8x4xf32>
    %48 = vector.shape_cast %47 : vector<1x8x4xf32> to vector<8x4xf32>
    %cst_43 = arith.constant dense<0.000000e+00> : vector<8x384xf32>
    %49 = tpu.matmul %48, %46, %cst_43 {dimension_numbers = #tpu.dot_dimension_numbers<[1], [0], [0], [1], [0, 0, 1, 1], [], []>} : vector<8x4xf32>, vector<4x384xf32>, vector<8x384xf32> -> vector<8x384xf32>
    %50 = arith.addf %44, %49 : vector<8x384xf32>
    %c0_44 = arith.constant 0 : index
    %c0_45 = arith.constant 0 : index
    %c38 = arith.constant 38 : index
    %51 = vector.load %arg1[%c0_44, %c0_45, %c38] : memref<1x4x512xf32, #tpu.memory_space<vmem>>, vector<1x4x384xf32>
    %52 = vector.shape_cast %51 : vector<1x4x384xf32> to vector<4x384xf32>
    %c8 = arith.constant 8 : index
    %c0_46 = arith.constant 0 : index
    %c0_47 = arith.constant 0 : index
    %53 = vector.load %arg2[%c8, %c0_46, %c0_47] : memref<9x8x4xf32, #tpu.memory_space<vmem>>, vector<1x8x4xf32>
    %54 = vector.shape_cast %53 : vector<1x8x4xf32> to vector<8x4xf32>
    %cst_48 = arith.constant dense<0.000000e+00> : vector<8x384xf32>
    %55 = tpu.matmul %54, %52, %cst_48 {dimension_numbers = #tpu.dot_dimension_numbers<[1], [0], [0], [1], [0, 0, 1, 1], [], []>} : vector<8x4xf32>, vector<4x384xf32>, vector<8x384xf32> -> vector<8x384xf32>
    %56 = arith.addf %50, %55 : vector<8x384xf32>
    %c0_49 = arith.constant 0 : index
    %c0_50 = arith.constant 0 : index
    %c0_51 = arith.constant 0 : index
    %57 = vector.load %arg4[%c0_49, %c0_50, %c0_51] : memref<1x8x384xf32, #tpu.memory_space<vmem>>, vector<1x8x384xf32>
    %58 = vector.shape_cast %57 : vector<1x8x384xf32> to vector<8x384xf32>
    %59 = vector.shape_cast %56 : vector<8x384xf32> to vector<1x8x384xf32>
    tpu.vector_store %arg4[%c0_49, %c0_50, %c0_51], %59 {strides = array<i32>} : memref<1x8x384xf32, #tpu.memory_space<vmem>>, vector<1x8x384xf32>,
    return
  }
  func.func @transform_0(%arg0: i32) -> (i32, i32, i32) {
    %c0_i32 = arith.constant 0 : i32
    %c0_i32_0 = arith.constant 0 : i32
    %c0_i32_1 = arith.constant 0 : i32
    return %arg0, %c0_i32, %c0_i32_0 : i32, i32, i32
  }
  func.func @transform_1(%arg0: i32) -> (i32, i32, i32) {
    %c0_i32 = arith.constant 0 : i32
    %c0_i32_0 = arith.constant 0 : i32
    %c0_i32_1 = arith.constant 0 : i32
    %c0_i32_2 = arith.constant 0 : i32
    return %c0_i32, %c0_i32_0, %c0_i32_1 : i32, i32, i32
  }
  func.func @transform_2(%arg0: i32) -> (i32, i32) {
    %c0_i32 = arith.constant 0 : i32
    %c0_i32_0 = arith.constant 0 : i32
    %c0_i32_1 = arith.constant 0 : i32
    return %c0_i32, %c0_i32_0 : i32, i32
  }
  func.func @transform_3(%arg0: i32) -> (i32, i32, i32) {
    %c0_i32 = arith.constant 0 : i32
    %c0_i32_0 = arith.constant 0 : i32
    %c0_i32_1 = arith.constant 0 : i32
    return %arg0, %c0_i32, %c0_i32_0 : i32, i32, i32
  }
}

</mosaic_0001>

<llo_original>
// kernel: reflect_conv_forward.1
$region0: #{reflect_conv_forward.1}
  #allocation0 [shape = 'u32[]', space=smem, size = 0x4, offset = 0x4, fixed_abs, tag = 'smem constant byte address 0x4 - core index']
  #allocation1 [shape = 'u32[144,128]{1,0:T(1,128)}', space=vmem, size = 0x12000, scoped, tag = 'internal scratch']
  %s0 = inlined_call_operand.vmem [shape: f32[2,4,512], index: 0, kind: input, shape index: {}]
  %s1 = inlined_call_operand.vmem [shape: f32[9,8,4], index: 1, kind: input, shape index: {}]
  %s2 = inlined_call_operand.vmem [shape: f32[8,1], index: 2, kind: input, shape index: {}]
  %s3 = inlined_call_operand.vmem [shape: f32[2,8,384], index: 3, kind: output, shape index: {}]
  %s4 = sld [smem:[#allocation0]]
  $region45: #{reflect_conv_forward.1} parent=0
    _
  %s6 = ssub.s32 1, %s4
  %s7 = scalar_select 0, %s6, %s4
  loop: start=0, step=1, limit=4
  $region2: #{reflect_conv_forward.1} parent=0 // loop_pre_header
    _
  $region3: #{reflect_conv_forward.1} parent=0 // loop_header
    %s9 = sphi 0, %s13
    %p10 = scmp.ge.s32.totalorder %s9, 4
    %s19 = sphi 0, %s21
    %s22 = sphi 0, %s19
    %s23 = sphi 0, %s22
    %s39 = sphi 0, %s23
    %s43 = sphi 0, %s43
    %s45 = sphi 0, %s43
    %s46 = sphi 0, %s45
    %s60 = sphi 0, %s46
    %s64 = sphi 0, %s64
    %s66 = sphi 0, %s64
    %s67 = sphi 0, %s66
    %s81 = sphi 0, %s67
    %s87 = sphi 0, %s89
    %s90 = sphi 0, %s87
    %s91 = sphi 0, %s90
    %s107 = sphi 0, %s91
  $region4: #{reflect_conv_forward.1} parent=0 // loop_header_branch
    %12 = sbr.rel (%p10) target = $region8
  $region5: #{reflect_conv_forward.1} parent=0 // loop_body
    %s14 = ssub.s32 %s9, 1
    %s15 = ssub.s32 %s9, 2
    %s16 = sadd.s32 %s9, 1
    %s17 = ssub.s32 %s9, %s16
    %p18 = scmp.eq.s32.totalorder %s17, 0
    %s20 = sadd.s32 %s19, 1
    %s21 = scalar_select %p18, %s19, %s20
    %p24 = pneg %p18
    %p25 = scmp.eq.s32.totalorder %s9, 1
    %p26 = por %p24, %p25
    %p27 = scmp.ne.s32.totalorder %s19, %s22
    %p28 = scmp.eq.s32.totalorder %s9, 0
    %p29 = por %p27, %p28
    %p30 = scmp.ne.s32.totalorder %s19, %s22
    %p31 = scmp.eq.s32.totalorder %s14, 1
    %p32 = por %p30, %p31
    %p33 = scmp.ne.s32.totalorder %s22, %s23
    %p34 = scmp.eq.s32.totalorder %s14, 0
    %p35 = por %p33, %p34
    %p36 = scmp.ne.s32.totalorder %s22, %s23
    %p37 = scmp.eq.s32.totalorder %s15, 1
    %p38 = por %p36, %p37
    %p40 = scmp.ne.s32.totalorder %s23, %s39
    %p41 = scmp.eq.s32.totalorder %s15, 0
    %p42 = por %p40, %p41
    %s44 = sadd.s32 %s43, 1
    %p47 = scmp.eq.s32.totalorder %s9, 1
    %p48 = scmp.ne.s32.totalorder %s43, %s45
    %p49 = scmp.eq.s32.totalorder %s9, 0
    %p50 = por %p48, %p49
    %p51 = scmp.ne.s32.totalorder %s43, %s45
    %p52 = scmp.eq.s32.totalorder %s14, 1
    %p53 = por %p51, %p52
    %p54 = scmp.ne.s32.totalorder %s45, %s46
    %p55 = scmp.eq.s32.totalorder %s14, 0
    %p56 = por %p54, %p55
    %p57 = scmp.ne.s32.totalorder %s45, %s46
    %p58 = scmp.eq.s32.totalorder %s15, 1
    %p59 = por %p57, %p58
    %p61 = scmp.ne.s32.totalorder %s46, %s60
    %p62 = scmp.eq.s32.totalorder %s15, 0
    %p63 = por %p61, %p62
    %s65 = sadd.s32 %s64, 1
    %p68 = scmp.eq.s32.totalorder %s9, 1
    %p69 = scmp.ne.s32.totalorder %s64, %s66
    %p70 = scmp.eq.s32.totalorder %s9, 0
    %p71 = por %p69, %p70
    %p72 = scmp.ne.s32.totalorder %s64, %s66
    %p73 = scmp.eq.s32.totalorder %s14, 1
    %p74 = por %p72, %p73
    %p75 = scmp.ne.s32.totalorder %s66, %s67
    %p76 = scmp.eq.s32.totalorder %s14, 0
    %p77 = por %p75, %p76
    %p78 = scmp.ne.s32.totalorder %s66, %s67
    %p79 = scmp.eq.s32.totalorder %s15, 1
    %p80 = por %p78, %p79
    %p82 = scmp.ne.s32.totalorder %s67, %s81
    %p83 = scmp.eq.s32.totalorder %s15, 0
    %p84 = por %p82, %p83
    %s85 = ssub.s32 %s9, %s16
    %p86 = scmp.eq.s32.totalorder %s85, 0
    %s88 = sadd.s32 %s87, 1
    %s89 = scalar_select %p86, %s87, %s88
    %p92 = pneg %p86
    %p93 = scmp.eq.s32.totalorder %s9, 1
    %p94 = por %p92, %p93
    %p95 = scmp.ne.s32.totalorder %s87, %s90
    %p96 = scmp.eq.s32.totalorder %s9, 0
    %p97 = por %p95, %p96
    %p98 = scmp.ne.s32.totalorder %s87, %s90
    %p99 = scmp.eq.s32.totalorder %s14, 1
    %p100 = por %p98, %p99
    %p101 = scmp.ne.s32.totalorder %s90, %s91
    %p102 = scmp.eq.s32.totalorder %s14, 0
    %p103 = por %p101, %p102
    %p104 = scmp.ne.s32.totalorder %s90, %s91
    %p105 = scmp.eq.s32.totalorder %s15, 1
    %p106 = por %p104, %p105
    %p108 = scmp.ne.s32.totalorder %s91, %s107
    %p109 = scmp.eq.s32.totalorder %s15, 0
    %p110 = por %p108, %p109
    %p111 = scmp.le.s32.totalorder 1, %s9
    %p112 = scmp.lt.s32.totalorder %s9, 3
    %p113 = pnand %p111, %p112
    %p114 = pneg %p113
    // Predicated region
    $region9: #{reflect_conv_forward.1} parent=5 // pred_check
      _
    $region10: #{reflect_conv_forward.1} parent=5 // pred_check_branch
      %116 = sbr.rel (%p113) target = $region12
    $region11: #{reflect_conv_forward.1} parent=5 // pred_region
      %s117 = ssub.s32 %s9, 1
      // Predicated region
      $region13: #{reflect_conv_forward.1} parent=11 // pred_check
        %p118 = pneg %p56
      $region14: #{reflect_conv_forward.1} parent=11 // pred_check_branch
        %120 = sbr.rel (%p118) target = $region16
      $region15: #{reflect_conv_forward.1} parent=11 // pred_region
        _
      $region16: #{reflect_conv_forward.1} parent=11 // pred_fallthru
        _
      // Predicated region
      $region17: #{reflect_conv_forward.1} parent=11 // pred_check
        %p121 = pneg %p77
      $region18: #{reflect_conv_forward.1} parent=11 // pred_check_branch
        %123 = sbr.rel (%p121) target = $region20
      $region19: #{reflect_conv_forward.1} parent=11 // pred_region
        _
      $region20: #{reflect_conv_forward.1} parent=11 // pred_fallthru
        _
    $region12: #{reflect_conv_forward.1} parent=5 // pred_fallthru
      _
    %p124 = scmp.lt.s32.totalorder %s9, 2
    // Predicated region
    $region21: #{reflect_conv_forward.1} parent=5 // pred_check
      %p125 = pneg %p124
    $region22: #{reflect_conv_forward.1} parent=5 // pred_check_branch
      %127 = sbr.rel (%p125) target = $region24
    $region23: #{reflect_conv_forward.1} parent=5 // pred_region
      // Predicated region
      $region25: #{reflect_conv_forward.1} parent=23 // pred_check
        %p128 = pneg %p29
      $region26: #{reflect_conv_forward.1} parent=23 // pred_check_branch
        %130 = sbr.rel (%p128) target = $region28
      $region27: #{reflect_conv_forward.1} parent=23 // pred_region
        %p131 = scmp.lt.s32.totalorder %s9, 1
        %s132 = scalar_select %p131, %s9, 1
        %s133 = smul.addr %s132, 4
        %s134 = smul.addr %s133, 4
        %s135 = scalar_lea.vmem %s0, %s134
      $region28: #{reflect_conv_forward.1} parent=23 // pred_fallthru
        _
    $region24: #{reflect_conv_forward.1} parent=5 // pred_fallthru
      _
    %p136 = scmp.le.s32.totalorder 1, %s9
    %p137 = scmp.lt.s32.totalorder %s9, 3
    %p138 = pnand %p136, %p137
    %p139 = pneg %p138
    // Predicated region
    $region29: #{reflect_conv_forward.1} parent=5 // pred_check
      _
    $region30: #{reflect_conv_forward.1} parent=5 // pred_check_branch
      %141 = sbr.rel (%p138) target = $region32
    $region31: #{reflect_conv_forward.1} parent=5 // pred_region
      %s142 = ssub.s32 %s9, 1
      %p143 = scmp.lt.s32.totalorder %s14, 1
      %s144 = scalar_select %p143, %s14, 1
      %s145 = smul.addr %s144, 4
      %s146 = smul.addr %s145, 4
      %s147 = scalar_lea.vmem %s0, %s146
      %p148 = pneg %p35
      %p149 = pneg %p32
      %p150 = pneg %p56
      %p151 = pneg %p53
      %p152 = pneg %p77
      %p153 = pneg %p74
      %p154 = pneg %p103
      %p155 = pneg %p100
      %p156 = scmp.lt.s32.totalorder %s14, 1
      %s157 = scalar_select %p156, %s14, 1
      %s158 = smul.addr %s157, 3
      %s159 = smul.addr %s158, 8
      %s160 = scalar_lea.vmem %s3, %s159
      %p161 = scmp.lt.s32.totalorder %s14, 1
      %s162 = scalar_select %p161, %s14, 1
      %s163 = smul.addr %s162, 4
      %s164 = smul.addr %s163, 4
      %s165 = scalar_lea.vmem %s0, %s164
      %p166 = scmp.lt.s32.totalorder %s14, 1
      %s167 = scalar_select %p166, %s14, 1
      %s168 = smul.addr %s167, 3
      %s169 = smul.addr %s168, 8
      %s170 = scalar_lea.vmem %s3, %s169
      %v171 = vld [vmem:[%s2] sm:$0xff]
      %173 = vset.pattern.permute.xlu0 0
      %174 = vperm.xlu0 %173, %v171
      %v175 = vpop.permute.xlu0 %174
      %v177 = vld [vmem:[%s165] sm:$0xff]
      %v178 = vld [vmem:[%s165 + $0x8] sm:$0xf]
      %v179 = vld [vmem:[%s1] sm:$0xff]
      %v182 = vcombine.high %v177, %v177
      %vm183 = vcmask 31744
      %v185 = vsel %vm183, %v179, 0
      %vm187 = vcmask 1043456
      %v188 = vsel %vm187, %v177, 0
      %v190 = vsel %vm187, %v182, 0
      %v192 = vsel %vm187, %v178, 0
      %194 = vmatprep.subr.mxu0 %v190
      %195 = vmatpush1.msra.mxu0 %v188
      %196 = vmatprep.subr.mxu0 0.0
      %197 = vmatpush1.msra.mxu0 0.0
      %198 = vmatprep.subr.mxu0 0.0
      %199 = vmatpush1.msra.mxu0 0.0
      %200 = vmatprep.subr.mxu0 0.0
      %201 = vmatpush1.msra.mxu0 0.0
      %202 = vmatprep.subr.mxu0 0.0
      %203 = vmatpush1.msra.mxu0 0.0
      %204 = vmatprep.subr.mxu0 0.0
      %205 = vmatpush1.msra.mxu0 0.0
      %206 = vmatprep.subr.mxu0 0.0
      %207 = vmatpush1.msra.mxu0 0.0
      %208 = vmatprep.subr.mxu0 0.0
      %209 = vmatpush1.msra.mxu0 0.0
      %210 = vmatprep.subr.mxu0 0.0
      %211 = vmatpush1.msra.mxu0 0.0
      %212 = vmatprep.subr.mxu0 0.0
      %213 = vmatpush1.msra.mxu0 0.0
      %214 = vmatprep.subr.mxu0 0.0
      %215 = vmatpush1.msra.mxu0 0.0
      %216 = vmatprep.subr.mxu0 0.0
      %217 = vmatpush1.msra.mxu0 0.0
      %218 = vmatprep.subr.mxu0 0.0
      %219 = vmatpush1.msra.mxu0 0.0
      %220 = vmatprep.subr.mxu0 0.0
      %221 = vmatpush1.msra.mxu0 0.0
      %222 = vmatprep.subr.mxu0 0.0
      %223 = vmatpush1.msra.mxu0 0.0
      %224 = vmatprep.subr.mxu0 0.0
      %225 = vmatpush1.msra.mxu0 0.0
      %226 = vmatprep.subr.mxu0 0.0
      %227 = vmatpush1.msra.mxu0 0.0
      %228 = vmatprep.subr.mxu0 0.0
      %229 = vmatpush1.msra.mxu0 0.0
      %230 = vmatprep.subr.mxu0 0.0
      %231 = vmatpush1.msra.mxu0 0.0
      %232 = vmatprep.subr.mxu0 0.0
      %233 = vmatpush1.msra.mxu0 0.0
      %234 = vmatprep.subr.mxu0 0.0
      %235 = vmatpush1.msra.mxu0 0.0
      %236 = vmatprep.subr.mxu0 0.0
      %237 = vmatpush1.msra.mxu0 0.0
      %238 = vmatprep.subr.mxu0 0.0
      %239 = vmatpush1.msra.mxu0 0.0
      %240 = vmatprep.subr.mxu0 0.0
      %241 = vmatpush1.msra.mxu0 0.0
      %242 = vmatprep.subr.mxu0 0.0
      %243 = vmatpush1.msra.mxu0 0.0
      %244 = vmatprep.subr.mxu0 0.0
      %245 = vmatpush1.msra.mxu0 0.0
      %246 = vmatprep.subr.mxu0 0.0
      %247 = vmatpush1.msra.mxu0 0.0
      %248 = vmatprep.subr.mxu0 0.0
      %249 = vmatpush1.msra.mxu0 0.0
      %250 = vmatprep.subr.mxu0 0.0
      %251 = vmatpush1.msra.mxu0 0.0
      %252 = vmatprep.subr.mxu0 0.0
      %253 = vmatpush1.msra.mxu0 0.0
      %254 = vmatprep.subr.mxu0 0.0
      %255 = vmatpush1.msra.mxu0 0.0
      %256 = vmatprep.subr.mxu0 0.0
      %257 = vmatpush1.msra.mxu0 0.0
      %258 = vmatprep.mubr.f32.mxu0 0.0
      %259 = vmatmul.mubr.f32.gmra.mrb[0].mxu0 %v185
      %v260 = vpop.f32.mrb[0].mxu0
      %v261 = vadd.f32 0.0, %v260
      %v262 = vpop.f32.mrb[0].mxu0
      %v263 = vadd.f32 0.0, %v262
      %264 = vdwg.mxu0
      %265 = vmatprep.subr.mxu0 0.0
      %266 = vmatpush1.msra.mxu0 %v192
      %267 = vmatprep.subr.mxu0 0.0
      %268 = vmatpush1.msra.mxu0 0.0
      %269 = vmatprep.subr.mxu0 0.0
      %270 = vmatpush1.msra.mxu0 0.0
      %271 = vmatprep.subr.mxu0 0.0
      %272 = vmatpush1.msra.mxu0 0.0
      %273 = vmatprep.subr.mxu0 0.0
      %274 = vmatpush1.msra.mxu0 0.0
      %275 = vmatprep.subr.mxu0 0.0
      %276 = vmatpush1.msra.mxu0 0.0
      %277 = vmatprep.subr.mxu0 0.0
      %278 = vmatpush1.msra.mxu0 0.0
      %279 = vmatprep.subr.mxu0 0.0
      %280 = vmatpush1.msra.mxu0 0.0
      %281 = vmatprep.subr.mxu0 0.0
      %282 = vmatpush1.msra.mxu0 0.0
      %283 = vmatprep.subr.mxu0 0.0
      %284 = vmatpush1.msra.mxu0 0.0
      %285 = vmatprep.subr.mxu0 0.0
      %286 = vmatpush1.msra.mxu0 0.0
      %287 = vmatprep.subr.mxu0 0.0
      %288 = vmatpush1.msra.mxu0 0.0
      %289 = vmatprep.subr.mxu0 0.0
      %290 = vmatpush1.msra.mxu0 0.0
      %291 = vmatprep.subr.mxu0 0.0
      %292 = vmatpush1.msra.mxu0 0.0
      %293 = vmatprep.subr.mxu0 0.0
      %294 = vmatpush1.msra.mxu0 0.0
      %295 = vmatprep.subr.mxu0 0.0
      %296 = vmatpush1.msra.mxu0 0.0
      %297 = vmatprep.subr.mxu0 0.0
      %298 = vmatpush1.msra.mxu0 0.0
      %299 = vmatprep.subr.mxu0 0.0
      %300 = vmatpush1.msra.mxu0 0.0
      %301 = vmatprep.subr.mxu0 0.0
      %302 = vmatpush1.msra.mxu0 0.0
      %303 = vmatprep.subr.mxu0 0.0
      %304 = vmatpush1.msra.mxu0 0.0
      %305 = vmatprep.subr.mxu0 0.0
      %306 = vmatpush1.msra.mxu0 0.0
      %307 = vmatprep.subr.mxu0 0.0
      %308 = vmatpush1.msra.mxu0 0.0
      %309 = vmatprep.subr.mxu0 0.0
      %310 = vmatpush1.msra.mxu0 0.0
      %311 = vmatprep.subr.mxu0 0.0
      %312 = vmatpush1.msra.mxu0 0.0
      %313 = vmatprep.subr.mxu0 0.0
      %314 = vmatpush1.msra.mxu0 0.0
      %315 = vmatprep.subr.mxu0 0.0
      %316 = vmatpush1.msra.mxu0 0.0
      %317 = vmatprep.subr.mxu0 0.0
      %318 = vmatpush1.msra.mxu0 0.0
      %319 = vmatprep.subr.mxu0 0.0
      %320 = vmatpush1.msra.mxu0 0.0
      %321 = vmatprep.subr.mxu0 0.0
      %322 = vmatpush1.msra.mxu0 0.0
      %323 = vmatprep.subr.mxu0 0.0
      %324 = vmatpush1.msra.mxu0 0.0
      %325 = vmatprep.subr.mxu0 0.0
      %326 = vmatpush1.msra.mxu0 0.0
      %327 = vmatprep.subr.mxu0 0.0
      %328 = vmatpush1.msra.mxu0 0.0
      %329 = vmatprep.mubr.f32.mxu0 0.0
      %330 = vmatmul.mubr.f32.gmra.mrb[0].mxu0 %v185
      %v331 = vpop.f32.mrb[0].mxu0
      %v332 = vadd.f32 0.0, %v331
      %v333 = vpop.f32.mrb[0].mxu0
      %334 = vdwg.mxu0
      %v335 = vadd.f32 %v175, %v261
      %v336 = vadd.f32 %v175, %v263
      %v337 = vadd.f32 %v175, %v332
      %v338 = vld [vmem:[%s165] sm:$0xff]
      %v339 = vld [vmem:[%s165 + $0x8] sm:$0xff]
      %s340 = scalar_lea.vmem %s1, 8
      %v341 = vld [vmem:[%s340] sm:$0xff]
      %v344 = vcombine.high %v338, %v338
      %v345 = vcombine.high %v339, %v339
      %346 = vrot.lane.b32.xlu0 %v338, 127
      %v347 = vpop.permute.xlu0 %346
      %348 = vrot.lane.b32.xlu0 %v344, 127
      %v349 = vpop.permute.xlu0 %348
      %350 = vrot.lane.b32.xlu0 %v339, 127
      %v351 = vpop.permute.xlu0 %350
      %352 = vrot.lane.b32.xlu0 %v345, 127
      %v353 = vpop.permute.xlu0 %352
      %vm354 = vcmask 1039360
      %v355 = vsel %vm354, %v347, %v349
      %v356 = vsel %vm354, %v349, %v351
      %v357 = vsel %vm354, %v351, %v353
      %v359 = vsel %vm183, %v341, 0
      %v361 = vsel %vm187, %v355, 0
      %v363 = vsel %vm187, %v356, 0
      %v365 = vsel %vm187, %v357, 0
      %367 = vmatprep.subr.mxu0 %v363
      %368 = vmatpush1.msra.mxu0 %v361
      %369 = vmatprep.subr.mxu0 0.0
      %370 = vmatpush1.msra.mxu0 0.0
      %371 = vmatprep.subr.mxu0 0.0
      %372 = vmatpush1.msra.mxu0 0.0
      %373 = vmatprep.subr.mxu0 0.0
      %374 = vmatpush1.msra.mxu0 0.0
      %375 = vmatprep.subr.mxu0 0.0
      %376 = vmatpush1.msra.mxu0 0.0
      %377 = vmatprep.subr.mxu0 0.0
      %378 = vmatpush1.msra.mxu0 0.0
      %379 = vmatprep.subr.mxu0 0.0
      %380 = vmatpush1.msra.mxu0 0.0
      %381 = vmatprep.subr.mxu0 0.0
      %382 = vmatpush1.msra.mxu0 0.0
      %383 = vmatprep.subr.mxu0 0.0
      %384 = vmatpush1.msra.mxu0 0.0
      %385 = vmatprep.subr.mxu0 0.0
      %386 = vmatpush1.msra.mxu0 0.0
      %387 = vmatprep.subr.mxu0 0.0
      %388 = vmatpush1.msra.mxu0 0.0
      %389 = vmatprep.subr.mxu0 0.0
      %390 = vmatpush1.msra.mxu0 0.0
      %391 = vmatprep.subr.mxu0 0.0
      %392 = vmatpush1.msra.mxu0 0.0
      %393 = vmatprep.subr.mxu0 0.0
      %394 = vmatpush1.msra.mxu0 0.0
      %395 = vmatprep.subr.mxu0 0.0
      %396 = vmatpush1.msra.mxu0 0.0
      %397 = vmatprep.subr.mxu0 0.0
      %398 = vmatpush1.msra.mxu0 0.0
      %399 = vmatprep.subr.mxu0 0.0
      %400 = vmatpush1.msra.mxu0 0.0
      %401 = vmatprep.subr.mxu0 0.0
      %402 = vmatpush1.msra.mxu0 0.0
      %403 = vmatprep.subr.mxu0 0.0
      %404 = vmatpush1.msra.mxu0 0.0
      %405 = vmatprep.subr.mxu0 0.0
      %406 = vmatpush1.msra.mxu0 0.0
      %407 = vmatprep.subr.mxu0 0.0
      %408 = vmatpush1.msra.mxu0 0.0
      %409 = vmatprep.subr.mxu0 0.0
      %410 = vmatpush1.msra.mxu0 0.0
      %411 = vmatprep.subr.mxu0 0.0
      %412 = vmatpush1.msra.mxu0 0.0
      %413 = vmatprep.subr.mxu0 0.0
      %414 = vmatpush1.msra.mxu0 0.0
      %415 = vmatprep.subr.mxu0 0.0
      %416 = vmatpush1.msra.mxu0 0.0
      %417 = vmatprep.subr.mxu0 0.0
      %418 = vmatpush1.msra.mxu0 0.0
      %419 = vmatprep.subr.mxu0 0.0
      %420 = vmatpush1.msra.mxu0 0.0
      %421 = vmatprep.subr.mxu0 0.0
      %422 = vmatpush1.msra.mxu0 0.0
      %423 = vmatprep.subr.mxu0 0.0
      %424 = vmatpush1.msra.mxu0 0.0
      %425 = vmatprep.subr.mxu0 0.0
      %426 = vmatpush1.msra.mxu0 0.0
      %427 = vmatprep.subr.mxu0 0.0
      %428 = vmatpush1.msra.mxu0 0.0
      %429 = vmatprep.subr.mxu0 0.0
      %430 = vmatpush1.msra.mxu0 0.0
      %431 = vmatprep.mubr.f32.mxu0 0.0
      %432 = vmatmul.mubr.f32.gmra.mrb[0].mxu0 %v359
      %v433 = vpop.f32.mrb[0].mxu0
      %v434 = vadd.f32 0.0, %v433
      %v435 = vpop.f32.mrb[0].mxu0
      %v436 = vadd.f32 0.0, %v435
      %437 = vdwg.mxu0
      %438 = vmatprep.subr.mxu0 0.0
      %439 = vmatpush1.msra.mxu0 %v365
      %440 = vmatprep.subr.mxu0 0.0
      %441 = vmatpush1.msra.mxu0 0.0
      %442 = vmatprep.subr.mxu0 0.0
      %443 = vmatpush1.msra.mxu0 0.0
      %444 = vmatprep.subr.mxu0 0.0
      %445 = vmatpush1.msra.mxu0 0.0
      %446 = vmatprep.subr.mxu0 0.0
      %447 = vmatpush1.msra.mxu0 0.0
      %448 = vmatprep.subr.mxu0 0.0
      %449 = vmatpush1.msra.mxu0 0.0
      %450 = vmatprep.subr.mxu0 0.0
      %451 = vmatpush1.msra.mxu0 0.0
      %452 = vmatprep.subr.mxu0 0.0
      %453 = vmatpush1.msra.mxu0 0.0
      %454 = vmatprep.subr.mxu0 0.0
      %455 = vmatpush1.msra.mxu0 0.0
      %456 = vmatprep.subr.mxu0 0.0
      %457 = vmatpush1.msra.mxu0 0.0
      %458 = vmatprep.subr.mxu0 0.0
      %459 = vmatpush1.msra.mxu0 0.0
      %460 = vmatprep.subr.mxu0 0.0
      %461 = vmatpush1.msra.mxu0 0.0
      %462 = vmatprep.subr.mxu0 0.0
      %463 = vmatpush1.msra.mxu0 0.0
      %464 = vmatprep.subr.mxu0 0.0
      %465 = vmatpush1.msra.mxu0 0.0
      %466 = vmatprep.subr.mxu0 0.0
      %467 = vmatpush1.msra.mxu0 0.0
      %468 = vmatprep.subr.mxu0 0.0
      %469 = vmatpush1.msra.mxu0 0.0
      %470 = vmatprep.subr.mxu0 0.0
      %471 = vmatpush1.msra.mxu0 0.0
      %472 = vmatprep.subr.mxu0 0.0
      %473 = vmatpush1.msra.mxu0 0.0
      %474 = vmatprep.subr.mxu0 0.0
      %475 = vmatpush1.msra.mxu0 0.0
      %476 = vmatprep.subr.mxu0 0.0
      %477 = vmatpush1.msra.mxu0 0.0
      %478 = vmatprep.subr.mxu0 0.0
      %479 = vmatpush1.msra.mxu0 0.0
      %480 = vmatprep.subr.mxu0 0.0
      %481 = vmatpush1.msra.mxu0 0.0
      %482 = vmatprep.subr.mxu0 0.0
      %483 = vmatpush1.msra.mxu0 0.0
      %484 = vmatprep.subr.mxu0 0.0
      %485 = vmatpush1.msra.mxu0 0.0
      %486 = vmatprep.subr.mxu0 0.0
      %487 = vmatpush1.msra.mxu0 0.0
      %488 = vmatprep.subr.mxu0 0.0
      %489 = vmatpush1.msra.mxu0 0.0
      %490 = vmatprep.subr.mxu0 0.0
      %491 = vmatpush1.msra.mxu0 0.0
      %492 = vmatprep.subr.mxu0 0.0
      %493 = vmatpush1.msra.mxu0 0.0
      %494 = vmatprep.subr.mxu0 0.0
      %495 = vmatpush1.msra.mxu0 0.0
      %496 = vmatprep.subr.mxu0 0.0
      %497 = vmatpush1.msra.mxu0 0.0
      %498 = vmatprep.subr.mxu0 0.0
      %499 = vmatpush1.msra.mxu0 0.0
      %500 = vmatprep.subr.mxu0 0.0
      %501 = vmatpush1.msra.mxu0 0.0
      %502 = vmatprep.mubr.f32.mxu0 0.0
      %503 = vmatmul.mubr.f32.gmra.mrb[0].mxu0 %v359
      %v504 = vpop.f32.mrb[0].mxu0
      %v505 = vadd.f32 0.0, %v504
      %v506 = vpop.f32.mrb[0].mxu0
      %507 = vdwg.mxu0
      %v508 = vadd.f32 %v335, %v434
      %v509 = vadd.f32 %v336, %v436
      %v510 = vadd.f32 %v337, %v505
      %v511 = vld [vmem:[%s165] sm:$0xff]
      %v512 = vld [vmem:[%s165 + $0x8] sm:$0xff]
      %s513 = scalar_lea.vmem %s1, 16
      %v514 = vld [vmem:[%s513] sm:$0xff]
      %v517 = vcombine.high %v511, %v511
      %v518 = vcombine.high %v512, %v512
      %519 = vrot.lane.b32.xlu0 %v511, 126
      %v520 = vpop.permute.xlu0 %519
      %521 = vrot.lane.b32.xlu0 %v517, 126
      %v522 = vpop.permute.xlu0 %521
      %523 = vrot.lane.b32.xlu0 %v512, 126
      %v524 = vpop.permute.xlu0 %523
      %525 = vrot.lane.b32.xlu0 %v518, 126
      %v526 = vpop.permute.xlu0 %525
      %vm527 = vcmask 1031168
      %v528 = vsel %vm527, %v520, %v522
      %v529 = vsel %vm527, %v522, %v524
      %v530 = vsel %vm527, %v524, %v526
      %v532 = vsel %vm183, %v514, 0
      %v534 = vsel %vm187, %v528, 0
      %v536 = vsel %vm187, %v529, 0
      %v538 = vsel %vm187, %v530, 0
      %540 = vmatprep.subr.mxu0 %v536
      %541 = vmatpush1.msra.mxu0 %v534
      %542 = vmatprep.subr.mxu0 0.0
      %543 = vmatpush1.msra.mxu0 0.0
      %544 = vmatprep.subr.mxu0 0.0
      %545 = vmatpush1.msra.mxu0 0.0
      %546 = vmatprep.subr.mxu0 0.0
      %547 = vmatpush1.msra.mxu0 0.0
      %548 = vmatprep.subr.mxu0 0.0
      %549 = vmatpush1.msra.mxu0 0.0
      %550 = vmatprep.subr.mxu0 0.0
      %551 = vmatpush1.msra.mxu0 0.0
      %552 = vmatprep.subr.mxu0 0.0
      %553 = vmatpush1.msra.mxu0 0.0
      %554 = vmatprep.subr.mxu0 0.0
      %555 = vmatpush1.msra.mxu0 0.0
      %556 = vmatprep.subr.mxu0 0.0
      %557 = vmatpush1.msra.mxu0 0.0
      %558 = vmatprep.subr.mxu0 0.0
      %559 = vmatpush1.msra.mxu0 0.0
      %560 = vmatprep.subr.mxu0 0.0
      %561 = vmatpush1.msra.mxu0 0.0
      %562 = vmatprep.subr.mxu0 0.0
      %563 = vmatpush1.msra.mxu0 0.0
      %564 = vmatprep.subr.mxu0 0.0
      %565 = vmatpush1.msra.mxu0 0.0
      %566 = vmatprep.subr.mxu0 0.0
      %567 = vmatpush1.msra.mxu0 0.0
      %568 = vmatprep.subr.mxu0 0.0
      %569 = vmatpush1.msra.mxu0 0.0
      %570 = vmatprep.subr.mxu0 0.0
      %571 = vmatpush1.msra.mxu0 0.0
      %572 = vmatprep.subr.mxu0 0.0
      %573 = vmatpush1.msra.mxu0 0.0
      %574 = vmatprep.subr.mxu0 0.0
      %575 = vmatpush1.msra.mxu0 0.0
      %576 = vmatprep.subr.mxu0 0.0
      %577 = vmatpush1.msra.mxu0 0.0
      %578 = vmatprep.subr.mxu0 0.0
      %579 = vmatpush1.msra.mxu0 0.0
      %580 = vmatprep.subr.mxu0 0.0
      %581 = vmatpush1.msra.mxu0 0.0
      %582 = vmatprep.subr.mxu0 0.0
      %583 = vmatpush1.msra.mxu0 0.0
      %584 = vmatprep.subr.mxu0 0.0
      %585 = vmatpush1.msra.mxu0 0.0
      %586 = vmatprep.subr.mxu0 0.0
      %587 = vmatpush1.msra.mxu0 0.0
      %588 = vmatprep.subr.mxu0 0.0
      %589 = vmatpush1.msra.mxu0 0.0
      %590 = vmatprep.subr.mxu0 0.0
      %591 = vmatpush1.msra.mxu0 0.0
      %592 = vmatprep.subr.mxu0 0.0
      %593 = vmatpush1.msra.mxu0 0.0
      %594 = vmatprep.subr.mxu0 0.0
      %595 = vmatpush1.msra.mxu0 0.0
      %596 = vmatprep.subr.mxu0 0.0
      %597 = vmatpush1.msra.mxu0 0.0
      %598 = vmatprep.subr.mxu0 0.0
      %599 = vmatpush1.msra.mxu0 0.0
      %600 = vmatprep.subr.mxu0 0.0
      %601 = vmatpush1.msra.mxu0 0.0
      %602 = vmatprep.subr.mxu0 0.0
      %603 = vmatpush1.msra.mxu0 0.0
      %604 = vmatprep.mubr.f32.mxu0 0.0
      %605 = vmatmul.mubr.f32.gmra.mrb[0].mxu0 %v532
      %v606 = vpop.f32.mrb[0].mxu0
      %v607 = vadd.f32 0.0, %v606
      %v608 = vpop.f32.mrb[0].mxu0
      %v609 = vadd.f32 0.0, %v608
      %610 = vdwg.mxu0
      %611 = vmatprep.subr.mxu0 0.0
      %612 = vmatpush1.msra.mxu0 %v538
      %613 = vmatprep.subr.mxu0 0.0
      %614 = vmatpush1.msra.mxu0 0.0
      %615 = vmatprep.subr.mxu0 0.0
      %616 = vmatpush1.msra.mxu0 0.0
      %617 = vmatprep.subr.mxu0 0.0
      %618 = vmatpush1.msra.mxu0 0.0
      %619 = vmatprep.subr.mxu0 0.0
      %620 = vmatpush1.msra.mxu0 0.0
      %621 = vmatprep.subr.mxu0 0.0
      %622 = vmatpush1.msra.mxu0 0.0
      %623 = vmatprep.subr.mxu0 0.0
      %624 = vmatpush1.msra.mxu0 0.0
      %625 = vmatprep.subr.mxu0 0.0
      %626 = vmatpush1.msra.mxu0 0.0
      %627 = vmatprep.subr.mxu0 0.0
      %628 = vmatpush1.msra.mxu0 0.0
      %629 = vmatprep.subr.mxu0 0.0
      %630 = vmatpush1.msra.mxu0 0.0
      %631 = vmatprep.subr.mxu0 0.0
      %632 = vmatpush1.msra.mxu0 0.0
      %633 = vmatprep.subr.mxu0 0.0
      %634 = vmatpush1.msra.mxu0 0.0
      %635 = vmatprep.subr.mxu0 0.0
      %636 = vmatpush1.msra.mxu0 0.0
      %637 = vmatprep.subr.mxu0 0.0
      %638 = vmatpush1.msra.mxu0 0.0
      %639 = vmatprep.subr.mxu0 0.0
      %640 = vmatpush1.msra.mxu0 0.0
      %641 = vmatprep.subr.mxu0 0.0
      %642 = vmatpush1.msra.mxu0 0.0
      %643 = vmatprep.subr.mxu0 0.0
      %644 = vmatpush1.msra.mxu0 0.0
      %645 = vmatprep.subr.mxu0 0.0
      %646 = vmatpush1.msra.mxu0 0.0
      %647 = vmatprep.subr.mxu0 0.0
      %648 = vmatpush1.msra.mxu0 0.0
      %649 = vmatprep.subr.mxu0 0.0
      %650 = vmatpush1.msra.mxu0 0.0
      %651 = vmatprep.subr.mxu0 0.0
      %652 = vmatpush1.msra.mxu0 0.0
      %653 = vmatprep.subr.mxu0 0.0
      %654 = vmatpush1.msra.mxu0 0.0
      %655 = vmatprep.subr.mxu0 0.0
      %656 = vmatpush1.msra.mxu0 0.0
      %657 = vmatprep.subr.mxu0 0.0
      %658 = vmatpush1.msra.mxu0 0.0
      %659 = vmatprep.subr.mxu0 0.0
      %660 = vmatpush1.msra.mxu0 0.0
      %661 = vmatprep.subr.mxu0 0.0
      %662 = vmatpush1.msra.mxu0 0.0
      %663 = vmatprep.subr.mxu0 0.0
      %664 = vmatpush1.msra.mxu0 0.0
      %665 = vmatprep.subr.mxu0 0.0
      %666 = vmatpush1.msra.mxu0 0.0
      %667 = vmatprep.subr.mxu0 0.0
      %668 = vmatpush1.msra.mxu0 0.0
      %669 = vmatprep.subr.mxu0 0.0
      %670 = vmatpush1.msra.mxu0 0.0
      %671 = vmatprep.subr.mxu0 0.0
      %672 = vmatpush1.msra.mxu0 0.0
      %673 = vmatprep.subr.mxu0 0.0
      %674 = vmatpush1.msra.mxu0 0.0
      %675 = vmatprep.mubr.f32.mxu0 0.0
      %676 = vmatmul.mubr.f32.gmra.mrb[0].mxu0 %v532
      %v677 = vpop.f32.mrb[0].mxu0
      %v678 = vadd.f32 0.0, %v677
      %v679 = vpop.f32.mrb[0].mxu0
      %680 = vdwg.mxu0
      %v681 = vadd.f32 %v508, %v607
      %v682 = vadd.f32 %v509, %v609
      %v683 = vadd.f32 %v510, %v678
      %v684 = vld [vmem:[%s165] sm:$0xff]
      %v685 = vld [vmem:[%s165 + $0x8] sm:$0xff]
      %s686 = scalar_lea.vmem %s1, 24
      %v687 = vld [vmem:[%s686] sm:$0xff]
      %v690 = vcombine.high %v684, %v684
      %v691 = vcombine.high %v685, %v685
      %692 = vrot.lane.b32.xlu0 %v684, 110
      %v693 = vpop.permute.xlu0 %692
      %694 = vrot.lane.b32.xlu0 %v690, 110
      %v695 = vpop.permute.xlu0 %694
      %696 = vrot.lane.b32.xlu0 %v685, 110
      %v697 = vpop.permute.xlu0 %696
      %698 = vrot.lane.b32.xlu0 %v691, 110
      %v699 = vpop.permute.xlu0 %698
      %vm700 = vcmask 900096
      %v701 = vsel %vm700, %v693, %v695
      %v702 = vsel %vm700, %v695, %v697
      %v703 = vsel %vm700, %v697, %v699
      %v705 = vsel %vm183, %v687, 0
      %v707 = vsel %vm187, %v701, 0
      %v709 = vsel %vm187, %v702, 0
      %v711 = vsel %vm187, %v703, 0
      %713 = vmatprep.subr.mxu0 %v709
      %714 = vmatpush1.msra.mxu0 %v707
      %715 = vmatprep.subr.mxu0 0.0
      %716 = vmatpush1.msra.mxu0 0.0
      %717 = vmatprep.subr.mxu0 0.0
      %718 = vmatpush1.msra.mxu0 0.0
      %719 = vmatprep.subr.mxu0 0.0
      %720 = vmatpush1.msra.mxu0 0.0
      %721 = vmatprep.subr.mxu0 0.0
      %722 = vmatpush1.msra.mxu0 0.0
      %723 = vmatprep.subr.mxu0 0.0
      %724 = vmatpush1.msra.mxu0 0.0
      %725 = vmatprep.subr.mxu0 0.0
      %726 = vmatpush1.msra.mxu0 0.0
      %727 = vmatprep.subr.mxu0 0.0
      %728 = vmatpush1.msra.mxu0 0.0
      %729 = vmatprep.subr.mxu0 0.0
      %730 = vmatpush1.msra.mxu0 0.0
      %731 = vmatprep.subr.mxu0 0.0
      %732 = vmatpush1.msra.mxu0 0.0
      %733 = vmatprep.subr.mxu0 0.0
      %734 = vmatpush1.msra.mxu0 0.0
      %735 = vmatprep.subr.mxu0 0.0
      %736 = vmatpush1.msra.mxu0 0.0
      %737 = vmatprep.subr.mxu0 0.0
      %738 = vmatpush1.msra.mxu0 0.0
      %739 = vmatprep.subr.mxu0 0.0
      %740 = vmatpush1.msra.mxu0 0.0
      %741 = vmatprep.subr.mxu0 0.0
      %742 = vmatpush1.msra.mxu0 0.0
      %743 = vmatprep.subr.mxu0 0.0
      %744 = vmatpush1.msra.mxu0 0.0
      %745 = vmatprep.subr.mxu0 0.0
      %746 = vmatpush1.msra.mxu0 0.0
      %747 = vmatprep.subr.mxu0 0.0
      %748 = vmatpush1.msra.mxu0 0.0
      %749 = vmatprep.subr.mxu0 0.0
      %750 = vmatpush1.msra.mxu0 0.0
      %751 = vmatprep.subr.mxu0 0.0
      %752 = vmatpush1.msra.mxu0 0.0
      %753 = vmatprep.subr.mxu0 0.0
      %754 = vmatpush1.msra.mxu0 0.0
      %755 = vmatprep.subr.mxu0 0.0
      %756 = vmatpush1.msra.mxu0 0.0
      %757 = vmatprep.subr.mxu0 0.0
      %758 = vmatpush1.msra.mxu0 0.0
      %759 = vmatprep.subr.mxu0 0.0
      %760 = vmatpush1.msra.mxu0 0.0
      %761 = vmatprep.subr.mxu0 0.0
      %762 = vmatpush1.msra.mxu0 0.0
      %763 = vmatprep.subr.mxu0 0.0
      %764 = vmatpush1.msra.mxu0 0.0
      %765 = vmatprep.subr.mxu0 0.0
      %766 = vmatpush1.msra.mxu0 0.0
      %767 = vmatprep.subr.mxu0 0.0
      %768 = vmatpush1.msra.mxu0 0.0
      %769 = vmatprep.subr.mxu0 0.0
      %770 = vmatpush1.msra.mxu0 0.0
      %771 = vmatprep.subr.mxu0 0.0
      %772 = vmatpush1.msra.mxu0 0.0
      %773 = vmatprep.subr.mxu0 0.0
      %774 = vmatpush1.msra.mxu0 0.0
      %775 = vmatprep.subr.mxu0 0.0
      %776 = vmatpush1.msra.mxu0 0.0
      %777 = vmatprep.mubr.f32.mxu0 0.0
      %778 = vmatmul.mubr.f32.gmra.mrb[0].mxu0 %v705
      %v779 = vpop.f32.mrb[0].mxu0
      %v780 = vadd.f32 0.0, %v779
      %v781 = vpop.f32.mrb[0].mxu0
      %v782 = vadd.f32 0.0, %v781
      %783 = vdwg.mxu0
      %784 = vmatprep.subr.mxu0 0.0
      %785 = vmatpush1.msra.mxu0 %v711
      %786 = vmatprep.subr.mxu0 0.0
      %787 = vmatpush1.msra.mxu0 0.0
      %788 = vmatprep.subr.mxu0 0.0
      %789 = vmatpush1.msra.mxu0 0.0
      %790 = vmatprep.subr.mxu0 0.0
      %791 = vmatpush1.msra.mxu0 0.0
      %792 = vmatprep.subr.mxu0 0.0
      %793 = vmatpush1.msra.mxu0 0.0
      %794 = vmatprep.subr.mxu0 0.0
      %795 = vmatpush1.msra.mxu0 0.0
      %796 = vmatprep.subr.mxu0 0.0
      %797 = vmatpush1.msra.mxu0 0.0
      %798 = vmatprep.subr.mxu0 0.0
      %799 = vmatpush1.msra.mxu0 0.0
      %800 = vmatprep.subr.mxu0 0.0
      %801 = vmatpush1.msra.mxu0 0.0
      %802 = vmatprep.subr.mxu0 0.0
      %803 = vmatpush1.msra.mxu0 0.0
      %804 = vmatprep.subr.mxu0 0.0
      %805 = vmatpush1.msra.mxu0 0.0
      %806 = vmatprep.subr.mxu0 0.0
      %807 = vmatpush1.msra.mxu0 0.0
      %808 = vmatprep.subr.mxu0 0.0
      %809 = vmatpush1.msra.mxu0 0.0
      %810 = vmatprep.subr.mxu0 0.0
      %811 = vmatpush1.msra.mxu0 0.0
      %812 = vmatprep.subr.mxu0 0.0
      %813 = vmatpush1.msra.mxu0 0.0
      %814 = vmatprep.subr.mxu0 0.0
      %815 = vmatpush1.msra.mxu0 0.0
      %816 = vmatprep.subr.mxu0 0.0
      %817 = vmatpush1.msra.mxu0 0.0
      %818 = vmatprep.subr.mxu0 0.0
      %819 = vmatpush1.msra.mxu0 0.0
      %820 = vmatprep.subr.mxu0 0.0
      %821 = vmatpush1.msra.mxu0 0.0
      %822 = vmatprep.subr.mxu0 0.0
      %823 = vmatpush1.msra.mxu0 0.0
      %824 = vmatprep.subr.mxu0 0.0
      %825 = vmatpush1.msra.mxu0 0.0
      %826 = vmatprep.subr.mxu0 0.0
      %827 = vmatpush1.msra.mxu0 0.0
      %828 = vmatprep.subr.mxu0 0.0
      %829 = vmatpush1.msra.mxu0 0.0
      %830 = vmatprep.subr.mxu0 0.0
      %831 = vmatpush1.msra.mxu0 0.0
      %832 = vmatprep.subr.mxu0 0.0
      %833 = vmatpush1.msra.mxu0 0.0
      %834 = vmatprep.subr.mxu0 0.0
      %835 = vmatpush1.msra.mxu0 0.0
      %836 = vmatprep.subr.mxu0 0.0
      %837 = vmatpush1.msra.mxu0 0.0
      %838 = vmatprep.subr.mxu0 0.0
      %839 = vmatpush1.msra.mxu0 0.0
      %840 = vmatprep.subr.mxu0 0.0
      %841 = vmatpush1.msra.mxu0 0.0
      %842 = vmatprep.subr.mxu0 0.0
      %843 = vmatpush1.msra.mxu0 0.0
      %844 = vmatprep.subr.mxu0 0.0
      %845 = vmatpush1.msra.mxu0 0.0
      %846 = vmatprep.subr.mxu0 0.0
      %847 = vmatpush1.msra.mxu0 0.0
      %848 = vmatprep.mubr.f32.mxu0 0.0
      %849 = vmatmul.mubr.f32.gmra.mrb[0].mxu0 %v705
      %v850 = vpop.f32.mrb[0].mxu0
      %v851 = vadd.f32 0.0, %v850
      %v852 = vpop.f32.mrb[0].mxu0
      %853 = vdwg.mxu0
      %v854 = vadd.f32 %v681, %v780
      %v855 = vadd.f32 %v682, %v782
      %v856 = vadd.f32 %v683, %v851
      %v857 = vld [vmem:[%s165] sm:$0xff]
      %v858 = vld [vmem:[%s165 + $0x8] sm:$0xff]
      %s859 = scalar_lea.vmem %s1, 32
      %v860 = vld [vmem:[%s859] sm:$0xff]
      %v863 = vcombine.high %v857, %v857
      %v864 = vcombine.high %v858, %v858
      %865 = vrot.lane.b32.xlu0 %v857, 109
      %v866 = vpop.permute.xlu0 %865
      %867 = vrot.lane.b32.xlu0 %v863, 109
      %v868 = vpop.permute.xlu0 %867
      %869 = vrot.lane.b32.xlu0 %v858, 109
      %v870 = vpop.permute.xlu0 %869
      %871 = vrot.lane.b32.xlu0 %v864, 109
      %v872 = vpop.permute.xlu0 %871
      %vm873 = vcmask 891904
      %v874 = vsel %vm873, %v866, %v868
      %v875 = vsel %vm873, %v868, %v870
      %v876 = vsel %vm873, %v870, %v872
      %v878 = vsel %vm183, %v860, 0
      %v880 = vsel %vm187, %v874, 0
      %v882 = vsel %vm187, %v875, 0
      %v884 = vsel %vm187, %v876, 0
      %886 = vmatprep.subr.mxu0 %v882
      %887 = vmatpush1.msra.mxu0 %v880
      %888 = vmatprep.subr.mxu0 0.0
      %889 = vmatpush1.msra.mxu0 0.0
      %890 = vmatprep.subr.mxu0 0.0
      %891 = vmatpush1.msra.mxu0 0.0
      %892 = vmatprep.subr.mxu0 0.0
      %893 = vmatpush1.msra.mxu0 0.0
      %894 = vmatprep.subr.mxu0 0.0
      %895 = vmatpush1.msra.mxu0 0.0
      %896 = vmatprep.subr.mxu0 0.0
      %897 = vmatpush1.msra.mxu0 0.0
      %898 = vmatprep.subr.mxu0 0.0
      %899 = vmatpush1.msra.mxu0 0.0
      %900 = vmatprep.subr.mxu0 0.0
      %901 = vmatpush1.msra.mxu0 0.0
      %902 = vmatprep.subr.mxu0 0.0
      %903 = vmatpush1.msra.mxu0 0.0
      %904 = vmatprep.subr.mxu0 0.0
      %905 = vmatpush1.msra.mxu0 0.0
      %906 = vmatprep.subr.mxu0 0.0
      %907 = vmatpush1.msra.mxu0 0.0
      %908 = vmatprep.subr.mxu0 0.0
      %909 = vmatpush1.msra.mxu0 0.0
      %910 = vmatprep.subr.mxu0 0.0
      %911 = vmatpush1.msra.mxu0 0.0
      %912 = vmatprep.subr.mxu0 0.0
      %913 = vmatpush1.msra.mxu0 0.0
      %914 = vmatprep.subr.mxu0 0.0
      %915 = vmatpush1.msra.mxu0 0.0
      %916 = vmatprep.subr.mxu0 0.0
      %917 = vmatpush1.msra.mxu0 0.0
      %918 = vmatprep.subr.mxu0 0.0
      %919 = vmatpush1.msra.mxu0 0.0
      %920 = vmatprep.subr.mxu0 0.0
      %921 = vmatpush1.msra.mxu0 0.0
      %922 = vmatprep.subr.mxu0 0.0
      %923 = vmatpush1.msra.mxu0 0.0
      %924 = vmatprep.subr.mxu0 0.0
      %925 = vmatpush1.msra.mxu0 0.0
      %926 = vmatprep.subr.mxu0 0.0
      %927 = vmatpush1.msra.mxu0 0.0
      %928 = vmatprep.subr.mxu0 0.0
      %929 = vmatpush1.msra.mxu0 0.0
      %930 = vmatprep.subr.mxu0 0.0
      %931 = vmatpush1.msra.mxu0 0.0
      %932 = vmatprep.subr.mxu0 0.0
      %933 = vmatpush1.msra.mxu0 0.0
      %934 = vmatprep.subr.mxu0 0.0
      %935 = vmatpush1.msra.mxu0 0.0
      %936 = vmatprep.subr.mxu0 0.0
      %937 = vmatpush1.msra.mxu0 0.0
      %938 = vmatprep.subr.mxu0 0.0
      %939 = vmatpush1.msra.mxu0 0.0
      %940 = vmatprep.subr.mxu0 0.0
      %941 = vmatpush1.msra.mxu0 0.0
      %942 = vmatprep.subr.mxu0 0.0
      %943 = vmatpush1.msra.mxu0 0.0
      %944 = vmatprep.subr.mxu0 0.0
      %945 = vmatpush1.msra.mxu0 0.0
      %946 = vmatprep.subr.mxu0 0.0
      %947 = vmatpush1.msra.mxu0 0.0
      %948 = vmatprep.subr.mxu0 0.0
      %949 = vmatpush1.msra.mxu0 0.0
      %950 = vmatprep.mubr.f32.mxu0 0.0
      %951 = vmatmul.mubr.f32.gmra.mrb[0].mxu0 %v878
      %v952 = vpop.f32.mrb[0].mxu0
      %v953 = vadd.f32 0.0, %v952
      %v954 = vpop.f32.mrb[0].mxu0
      %v955 = vadd.f32 0.0, %v954
      %956 = vdwg.mxu0
      %957 = vmatprep.subr.mxu0 0.0
      %958 = vmatpush1.msra.mxu0 %v884
      %959 = vmatprep.subr.mxu0 0.0
      %960 = vmatpush1.msra.mxu0 0.0
      %961 = vmatprep.subr.mxu0 0.0
      %962 = vmatpush1.msra.mxu0 0.0
      %963 = vmatprep.subr.mxu0 0.0
      %964 = vmatpush1.msra.mxu0 0.0
      %965 = vmatprep.subr.mxu0 0.0
      %966 = vmatpush1.msra.mxu0 0.0
      %967 = vmatprep.subr.mxu0 0.0
      %968 = vmatpush1.msra.mxu0 0.0
      %969 = vmatprep.subr.mxu0 0.0
      %970 = vmatpush1.msra.mxu0 0.0
      %971 = vmatprep.subr.mxu0 0.0
      %972 = vmatpush1.msra.mxu0 0.0
      %973 = vmatprep.subr.mxu0 0.0
      %974 = vmatpush1.msra.mxu0 0.0
      %975 = vmatprep.subr.mxu0 0.0
      %976 = vmatpush1.msra.mxu0 0.0
      %977 = vmatprep.subr.mxu0 0.0
      %978 = vmatpush1.msra.mxu0 0.0
      %979 = vmatprep.subr.mxu0 0.0
      %980 = vmatpush1.msra.mxu0 0.0
      %981 = vmatprep.subr.mxu0 0.0
      %982 = vmatpush1.msra.mxu0 0.0
      %983 = vmatprep.subr.mxu0 0.0
      %984 = vmatpush1.msra.mxu0 0.0
      %985 = vmatprep.subr.mxu0 0.0
      %986 = vmatpush1.msra.mxu0 0.0
      %987 = vmatprep.subr.mxu0 0.0
      %988 = vmatpush1.msra.mxu0 0.0
      %989 = vmatprep.subr.mxu0 0.0
      %990 = vmatpush1.msra.mxu0 0.0
      %991 = vmatprep.subr.mxu0 0.0
      %992 = vmatpush1.msra.mxu0 0.0
      %993 = vmatprep.subr.mxu0 0.0
      %994 = vmatpush1.msra.mxu0 0.0
      %995 = vmatprep.subr.mxu0 0.0
      %996 = vmatpush1.msra.mxu0 0.0
      %997 = vmatprep.subr.mxu0 0.0
      %998 = vmatpush1.msra.mxu0 0.0
      %999 = vmatprep.subr.mxu0 0.0
      %1000 = vmatpush1.msra.mxu0 0.0
      %1001 = vmatprep.subr.mxu0 0.0
      %1002 = vmatpush1.msra.mxu0 0.0
      %1003 = vmatprep.subr.mxu0 0.0
      %1004 = vmatpush1.msra.mxu0 0.0
      %1005 = vmatprep.subr.mxu0 0.0
      %1006 = vmatpush1.msra.mxu0 0.0
      %1007 = vmatprep.subr.mxu0 0.0
      %1008 = vmatpush1.msra.mxu0 0.0
      %1009 = vmatprep.subr.mxu0 0.0
      %1010 = vmatpush1.msra.mxu0 0.0
      %1011 = vmatprep.subr.mxu0 0.0
      %1012 = vmatpush1.msra.mxu0 0.0
      %1013 = vmatprep.subr.mxu0 0.0
      %1014 = vmatpush1.msra.mxu0 0.0
      %1015 = vmatprep.subr.mxu0 0.0
      %1016 = vmatpush1.msra.mxu0 0.0
      %1017 = vmatprep.subr.mxu0 0.0
      %1018 = vmatpush1.msra.mxu0 0.0
      %1019 = vmatprep.subr.mxu0 0.0
      %1020 = vmatpush1.msra.mxu0 0.0
      %1021 = vmatprep.mubr.f32.mxu0 0.0
      %1022 = vmatmul.mubr.f32.gmra.mrb[0].mxu0 %v878
      %v1023 = vpop.f32.mrb[0].mxu0
      %v1024 = vadd.f32 0.0, %v1023
      %v1025 = vpop.f32.mrb[0].mxu0
      %1026 = vdwg.mxu0
      %v1027 = vadd.f32 %v854, %v953
      %v1028 = vadd.f32 %v855, %v955
      %v1029 = vadd.f32 %v856, %v1024
      %v1030 = vld [vmem:[%s165] sm:$0xff]
      %v1031 = vld [vmem:[%s165 + $0x8] sm:$0xff]
      %s1032 = scalar_lea.vmem %s1, 40
      %v1033 = vld [vmem:[%s1032] sm:$0xff]
      %v1036 = vcombine.high %v1030, %v1030
      %v1037 = vcombine.high %v1031, %v1031
      %1038 = vrot.lane.b32.xlu0 %v1030, 108
      %v1039 = vpop.permute.xlu0 %1038
      %1040 = vrot.lane.b32.xlu0 %v1036, 108
      %v1041 = vpop.permute.xlu0 %1040
      %1042 = vrot.lane.b32.xlu0 %v1031, 108
      %v1043 = vpop.permute.xlu0 %1042
      %1044 = vrot.lane.b32.xlu0 %v1037, 108
      %v1045 = vpop.permute.xlu0 %1044
      %vm1046 = vcmask 883712
      %v1047 = vsel %vm1046, %v1039, %v1041
      %v1048 = vsel %vm1046, %v1041, %v1043
      %v1049 = vsel %vm1046, %v1043, %v1045
      %v1051 = vsel %vm183, %v1033, 0
      %v1053 = vsel %vm187, %v1047, 0
      %v1055 = vsel %vm187, %v1048, 0
      %v1057 = vsel %vm187, %v1049, 0
      %1059 = vmatprep.subr.mxu0 %v1055
      %1060 = vmatpush1.msra.mxu0 %v1053
      %1061 = vmatprep.subr.mxu0 0.0
      %1062 = vmatpush1.msra.mxu0 0.0
      %1063 = vmatprep.subr.mxu0 0.0
      %1064 = vmatpush1.msra.mxu0 0.0
      %1065 = vmatprep.subr.mxu0 0.0
      %1066 = vmatpush1.msra.mxu0 0.0
      %1067 = vmatprep.subr.mxu0 0.0
      %1068 = vmatpush1.msra.mxu0 0.0
      %1069 = vmatprep.subr.mxu0 0.0
      %1070 = vmatpush1.msra.mxu0 0.0
      %1071 = vmatprep.subr.mxu0 0.0
      %1072 = vmatpush1.msra.mxu0 0.0
      %1073 = vmatprep.subr.mxu0 0.0
      %1074 = vmatpush1.msra.mxu0 0.0
      %1075 = vmatprep.subr.mxu0 0.0
      %1076 = vmatpush1.msra.mxu0 0.0
      %1077 = vmatprep.subr.mxu0 0.0
      %1078 = vmatpush1.msra.mxu0 0.0
      %1079 = vmatprep.subr.mxu0 0.0
      %1080 = vmatpush1.msra.mxu0 0.0
      %1081 = vmatprep.subr.mxu0 0.0
      %1082 = vmatpush1.msra.mxu0 0.0
      %1083 = vmatprep.subr.mxu0 0.0
      %1084 = vmatpush1.msra.mxu0 0.0
      %1085 = vmatprep.subr.mxu0 0.0
      %1086 = vmatpush1.msra.mxu0 0.0
      %1087 = vmatprep.subr.mxu0 0.0
      %1088 = vmatpush1.msra.mxu0 0.0
      %1089 = vmatprep.subr.mxu0 0.0
      %1090 = vmatpush1.msra.mxu0 0.0
      %1091 = vmatprep.subr.mxu0 0.0
      %1092 = vmatpush1.msra.mxu0 0.0
      %1093 = vmatprep.subr.mxu0 0.0
      %1094 = vmatpush1.msra.mxu0 0.0
      %1095 = vmatprep.subr.mxu0 0.0
      %1096 = vmatpush1.msra.mxu0 0.0
      %1097 = vmatprep.subr.mxu0 0.0
      %1098 = vmatpush1.msra.mxu0 0.0
      %1099 = vmatprep.subr.mxu0 0.0
      %1100 = vmatpush1.msra.mxu0 0.0
      %1101 = vmatprep.subr.mxu0 0.0
      %1102 = vmatpush1.msra.mxu0 0.0
      %1103 = vmatprep.subr.mxu0 0.0
      %1104 = vmatpush1.msra.mxu0 0.0
      %1105 = vmatprep.subr.mxu0 0.0
      %1106 = vmatpush1.msra.mxu0 0.0
      %1107 = vmatprep.subr.mxu0 0.0
      %1108 = vmatpush1.msra.mxu0 0.0
      %1109 = vmatprep.subr.mxu0 0.0
      %1110 = vmatpush1.msra.mxu0 0.0
      %1111 = vmatprep.subr.mxu0 0.0
      %1112 = vmatpush1.msra.mxu0 0.0
      %1113 = vmatprep.subr.mxu0 0.0
      %1114 = vmatpush1.msra.mxu0 0.0
      %1115 = vmatprep.subr.mxu0 0.0
      %1116 = vmatpush1.msra.mxu0 0.0
      %1117 = vmatprep.subr.mxu0 0.0
      %1118 = vmatpush1.msra.mxu0 0.0
      %1119 = vmatprep.subr.mxu0 0.0
      %1120 = vmatpush1.msra.mxu0 0.0
      %1121 = vmatprep.subr.mxu0 0.0
      %1122 = vmatpush1.msra.mxu0 0.0
      %1123 = vmatprep.mubr.f32.mxu0 0.0
      %1124 = vmatmul.mubr.f32.gmra.mrb[0].mxu0 %v1051
      %v1125 = vpop.f32.mrb[0].mxu0
      %v1126 = vadd.f32 0.0, %v1125
      %v1127 = vpop.f32.mrb[0].mxu0
      %v1128 = vadd.f32 0.0, %v1127
      %1129 = vdwg.mxu0
      %1130 = vmatprep.subr.mxu0 0.0
      %1131 = vmatpush1.msra.mxu0 %v1057
      %1132 = vmatprep.subr.mxu0 0.0
      %1133 = vmatpush1.msra.mxu0 0.0
      %1134 = vmatprep.subr.mxu0 0.0
      %1135 = vmatpush1.msra.mxu0 0.0
      %1136 = vmatprep.subr.mxu0 0.0
      %1137 = vmatpush1.msra.mxu0 0.0
      %1138 = vmatprep.subr.mxu0 0.0
      %1139 = vmatpush1.msra.mxu0 0.0
      %1140 = vmatprep.subr.mxu0 0.0
      %1141 = vmatpush1.msra.mxu0 0.0
      %1142 = vmatprep.subr.mxu0 0.0
      %1143 = vmatpush1.msra.mxu0 0.0
      %1144 = vmatprep.subr.mxu0 0.0
      %1145 = vmatpush1.msra.mxu0 0.0
      %1146 = vmatprep.subr.mxu0 0.0
      %1147 = vmatpush1.msra.mxu0 0.0
      %1148 = vmatprep.subr.mxu0 0.0
      %1149 = vmatpush1.msra.mxu0 0.0
      %1150 = vmatprep.subr.mxu0 0.0
      %1151 = vmatpush1.msra.mxu0 0.0
      %1152 = vmatprep.subr.mxu0 0.0
      %1153 = vmatpush1.msra.mxu0 0.0
      %1154 = vmatprep.subr.mxu0 0.0
      %1155 = vmatpush1.msra.mxu0 0.0
      %1156 = vmatprep.subr.mxu0 0.0
      %1157 = vmatpush1.msra.mxu0 0.0
      %1158 = vmatprep.subr.mxu0 0.0
      %1159 = vmatpush1.msra.mxu0 0.0
      %1160 = vmatprep.subr.mxu0 0.0
      %1161 = vmatpush1.msra.mxu0 0.0
      %1162 = vmatprep.subr.mxu0 0.0
      %1163 = vmatpush1.msra.mxu0 0.0
      %1164 = vmatprep.subr.mxu0 0.0
      %1165 = vmatpush1.msra.mxu0 0.0
      %1166 = vmatprep.subr.mxu0 0.0
      %1167 = vmatpush1.msra.mxu0 0.0
      %1168 = vmatprep.subr.mxu0 0.0
      %1169 = vmatpush1.msra.mxu0 0.0
      %1170 = vmatprep.subr.mxu0 0.0
      %1171 = vmatpush1.msra.mxu0 0.0
      %1172 = vmatprep.subr.mxu0 0.0
      %1173 = vmatpush1.msra.mxu0 0.0
      %1174 = vmatprep.subr.mxu0 0.0
      %1175 = vmatpush1.msra.mxu0 0.0
      %1176 = vmatprep.subr.mxu0 0.0
      %1177 = vmatpush1.msra.mxu0 0.0
      %1178 = vmatprep.subr.mxu0 0.0
      %1179 = vmatpush1.msra.mxu0 0.0
      %1180 = vmatprep.subr.mxu0 0.0
      %1181 = vmatpush1.msra.mxu0 0.0
      %1182 = vmatprep.subr.mxu0 0.0
      %1183 = vmatpush1.msra.mxu0 0.0
      %1184 = vmatprep.subr.mxu0 0.0
      %1185 = vmatpush1.msra.mxu0 0.0
      %1186 = vmatprep.subr.mxu0 0.0
      %1187 = vmatpush1.msra.mxu0 0.0
      %1188 = vmatprep.subr.mxu0 0.0
      %1189 = vmatpush1.msra.mxu0 0.0
      %1190 = vmatprep.subr.mxu0 0.0
      %1191 = vmatpush1.msra.mxu0 0.0
      %1192 = vmatprep.subr.mxu0 0.0
      %1193 = vmatpush1.msra.mxu0 0.0
      %1194 = vmatprep.mubr.f32.mxu0 0.0
      %1195 = vmatmul.mubr.f32.gmra.mrb[0].mxu0 %v1051
      %v1196 = vpop.f32.mrb[0].mxu0
      %v1197 = vadd.f32 0.0, %v1196
      %v1198 = vpop.f32.mrb[0].mxu0
      %1199 = vdwg.mxu0
      %v1200 = vadd.f32 %v1027, %v1126
      %v1201 = vadd.f32 %v1028, %v1128
      %v1202 = vadd.f32 %v1029, %v1197
      %v1203 = vld [vmem:[%s165] sm:$0xff]
      %v1204 = vld [vmem:[%s165 + $0x8] sm:$0xff]
      %s1205 = scalar_lea.vmem %s1, 48
      %v1206 = vld [vmem:[%s1205] sm:$0xff]
      %v1209 = vcombine.high %v1203, %v1203
      %v1210 = vcombine.high %v1204, %v1204
      %1211 = vrot.lane.b32.xlu0 %v1203, 92
      %v1212 = vpop.permute.xlu0 %1211
      %1213 = vrot.lane.b32.xlu0 %v1209, 92
      %v1214 = vpop.permute.xlu0 %1213
      %1215 = vrot.lane.b32.xlu0 %v1204, 92
      %v1216 = vpop.permute.xlu0 %1215
      %1217 = vrot.lane.b32.xlu0 %v1210, 92
      %v1218 = vpop.permute.xlu0 %1217
      %vm1219 = vcmask 752640
      %v1220 = vsel %vm1219, %v1212, %v1214
      %v1221 = vsel %vm1219, %v1214, %v1216
      %v1222 = vsel %vm1219, %v1216, %v1218
      %v1224 = vsel %vm183, %v1206, 0
      %v1226 = vsel %vm187, %v1220, 0
      %v1228 = vsel %vm187, %v1221, 0
      %v1230 = vsel %vm187, %v1222, 0
      %1232 = vmatprep.subr.mxu0 %v1228
      %1233 = vmatpush1.msra.mxu0 %v1226
      %1234 = vmatprep.subr.mxu0 0.0
      %1235 = vmatpush1.msra.mxu0 0.0
      %1236 = vmatprep.subr.mxu0 0.0
      %1237 = vmatpush1.msra.mxu0 0.0
      %1238 = vmatprep.subr.mxu0 0.0
      %1239 = vmatpush1.msra.mxu0 0.0
      %1240 = vmatprep.subr.mxu0 0.0
      %1241 = vmatpush1.msra.mxu0 0.0
      %1242 = vmatprep.subr.mxu0 0.0
      %1243 = vmatpush1.msra.mxu0 0.0
      %1244 = vmatprep.subr.mxu0 0.0
      %1245 = vmatpush1.msra.mxu0 0.0
      %1246 = vmatprep.subr.mxu0 0.0
      %1247 = vmatpush1.msra.mxu0 0.0
      %1248 = vmatprep.subr.mxu0 0.0
      %1249 = vmatpush1.msra.mxu0 0.0
      %1250 = vmatprep.subr.mxu0 0.0
      %1251 = vmatpush1.msra.mxu0 0.0
      %1252 = vmatprep.subr.mxu0 0.0
      %1253 = vmatpush1.msra.mxu0 0.0
      %1254 = vmatprep.subr.mxu0 0.0
      %1255 = vmatpush1.msra.mxu0 0.0
      %1256 = vmatprep.subr.mxu0 0.0
      %1257 = vmatpush1.msra.mxu0 0.0
      %1258 = vmatprep.subr.mxu0 0.0
      %1259 = vmatpush1.msra.mxu0 0.0
      %1260 = vmatprep.subr.mxu0 0.0
      %1261 = vmatpush1.msra.mxu0 0.0
      %1262 = vmatprep.subr.mxu0 0.0
      %1263 = vmatpush1.msra.mxu0 0.0
      %1264 = vmatprep.subr.mxu0 0.0
      %1265 = vmatpush1.msra.mxu0 0.0
      %1266 = vmatprep.subr.mxu0 0.0
      %1267 = vmatpush1.msra.mxu0 0.0
      %1268 = vmatprep.subr.mxu0 0.0
      %1269 = vmatpush1.msra.mxu0 0.0
      %1270 = vmatprep.subr.mxu0 0.0
      %1271 = vmatpush1.msra.mxu0 0.0
      %1272 = vmatprep.subr.mxu0 0.0
      %1273 = vmatpush1.msra.mxu0 0.0
      %1274 = vmatprep.subr.mxu0 0.0
      %1275 = vmatpush1.msra.mxu0 0.0
      %1276 = vmatprep.subr.mxu0 0.0
      %1277 = vmatpush1.msra.mxu0 0.0
      %1278 = vmatprep.subr.mxu0 0.0
      %1279 = vmatpush1.msra.mxu0 0.0
      %1280 = vmatprep.subr.mxu0 0.0
      %1281 = vmatpush1.msra.mxu0 0.0
      %1282 = vmatprep.subr.mxu0 0.0
      %1283 = vmatpush1.msra.mxu0 0.0
      %1284 = vmatprep.subr.mxu0 0.0
      %1285 = vmatpush1.msra.mxu0 0.0
      %1286 = vmatprep.subr.mxu0 0.0
      %1287 = vmatpush1.msra.mxu0 0.0
      %1288 = vmatprep.subr.mxu0 0.0
      %1289 = vmatpush1.msra.mxu0 0.0
      %1290 = vmatprep.subr.mxu0 0.0
      %1291 = vmatpush1.msra.mxu0 0.0
      %1292 = vmatprep.subr.mxu0 0.0
      %1293 = vmatpush1.msra.mxu0 0.0
      %1294 = vmatprep.subr.mxu0 0.0
      %1295 = vmatpush1.msra.mxu0 0.0
      %1296 = vmatprep.mubr.f32.mxu0 0.0
      %1297 = vmatmul.mubr.f32.gmra.mrb[0].mxu0 %v1224
      %v1298 = vpop.f32.mrb[0].mxu0
      %v1299 = vadd.f32 0.0, %v1298
      %v1300 = vpop.f32.mrb[0].mxu0
      %v1301 = vadd.f32 0.0, %v1300
      %1302 = vdwg.mxu0
      %1303 = vmatprep.subr.mxu0 0.0
      %1304 = vmatpush1.msra.mxu0 %v1230
      %1305 = vmatprep.subr.mxu0 0.0
      %1306 = vmatpush1.msra.mxu0 0.0
      %1307 = vmatprep.subr.mxu0 0.0
      %1308 = vmatpush1.msra.mxu0 0.0
      %1309 = vmatprep.subr.mxu0 0.0
      %1310 = vmatpush1.msra.mxu0 0.0
      %1311 = vmatprep.subr.mxu0 0.0
      %1312 = vmatpush1.msra.mxu0 0.0
      %1313 = vmatprep.subr.mxu0 0.0
      %1314 = vmatpush1.msra.mxu0 0.0
      %1315 = vmatprep.subr.mxu0 0.0
      %1316 = vmatpush1.msra.mxu0 0.0
      %1317 = vmatprep.subr.mxu0 0.0
      %1318 = vmatpush1.msra.mxu0 0.0
      %1319 = vmatprep.subr.mxu0 0.0
      %1320 = vmatpush1.msra.mxu0 0.0
      %1321 = vmatprep.subr.mxu0 0.0
      %1322 = vmatpush1.msra.mxu0 0.0
      %1323 = vmatprep.subr.mxu0 0.0
      %1324 = vmatpush1.msra.mxu0 0.0
      %1325 = vmatprep.subr.mxu0 0.0
      %1326 = vmatpush1.msra.mxu0 0.0
      %1327 = vmatprep.subr.mxu0 0.0
      %1328 = vmatpush1.msra.mxu0 0.0
      %1329 = vmatprep.subr.mxu0 0.0
      %1330 = vmatpush1.msra.mxu0 0.0
      %1331 = vmatprep.subr.mxu0 0.0
      %1332 = vmatpush1.msra.mxu0 0.0
      %1333 = vmatprep.subr.mxu0 0.0
      %1334 = vmatpush1.msra.mxu0 0.0
      %1335 = vmatprep.subr.mxu0 0.0
      %1336 = vmatpush1.msra.mxu0 0.0
      %1337 = vmatprep.subr.mxu0 0.0
      %1338 = vmatpush1.msra.mxu0 0.0
      %1339 = vmatprep.subr.mxu0 0.0
      %1340 = vmatpush1.msra.mxu0 0.0
      %1341 = vmatprep.subr.mxu0 0.0
      %1342 = vmatpush1.msra.mxu0 0.0
      %1343 = vmatprep.subr.mxu0 0.0
      %1344 = vmatpush1.msra.mxu0 0.0
      %1345 = vmatprep.subr.mxu0 0.0
      %1346 = vmatpush1.msra.mxu0 0.0
      %1347 = vmatprep.subr.mxu0 0.0
      %1348 = vmatpush1.msra.mxu0 0.0
      %1349 = vmatprep.subr.mxu0 0.0
      %1350 = vmatpush1.msra.mxu0 0.0
      %1351 = vmatprep.subr.mxu0 0.0
      %1352 = vmatpush1.msra.mxu0 0.0
      %1353 = vmatprep.subr.mxu0 0.0
      %1354 = vmatpush1.msra.mxu0 0.0
      %1355 = vmatprep.subr.mxu0 0.0
      %1356 = vmatpush1.msra.mxu0 0.0
      %1357 = vmatprep.subr.mxu0 0.0
      %1358 = vmatpush1.msra.mxu0 0.0
      %1359 = vmatprep.subr.mxu0 0.0
      %1360 = vmatpush1.msra.mxu0 0.0
      %1361 = vmatprep.subr.mxu0 0.0
      %1362 = vmatpush1.msra.mxu0 0.0
      %1363 = vmatprep.subr.mxu0 0.0
      %1364 = vmatpush1.msra.mxu0 0.0
      %1365 = vmatprep.subr.mxu0 0.0
      %1366 = vmatpush1.msra.mxu0 0.0
      %1367 = vmatprep.mubr.f32.mxu0 0.0
      %1368 = vmatmul.mubr.f32.gmra.mrb[0].mxu0 %v1224
      %v1369 = vpop.f32.mrb[0].mxu0
      %v1370 = vadd.f32 0.0, %v1369
      %v1371 = vpop.f32.mrb[0].mxu0
      %1372 = vdwg.mxu0
      %v1373 = vadd.f32 %v1200, %v1299
      %v1374 = vadd.f32 %v1201, %v1301
      %v1375 = vadd.f32 %v1202, %v1370
      %v1376 = vld [vmem:[%s165] sm:$0xff]
      %v1377 = vld [vmem:[%s165 + $0x8] sm:$0xff]
      %s1378 = scalar_lea.vmem %s1, 56
      %v1379 = vld [vmem:[%s1378] sm:$0xff]
      %v1382 = vcombine.high %v1376, %v1376
      %v1383 = vcombine.high %v1377, %v1377
      %1384 = vrot.lane.b32.xlu0 %v1376, 91
      %v1385 = vpop.permute.xlu0 %1384
      %1386 = vrot.lane.b32.xlu0 %v1382, 91
      %v1387 = vpop.permute.xlu0 %1386
      %1388 = vrot.lane.b32.xlu0 %v1377, 91
      %v1389 = vpop.permute.xlu0 %1388
      %1390 = vrot.lane.b32.xlu0 %v1383, 91
      %v1391 = vpop.permute.xlu0 %1390
      %vm1392 = vcmask 744448
      %v1393 = vsel %vm1392, %v1385, %v1387
      %v1394 = vsel %vm1392, %v1387, %v1389
      %v1395 = vsel %vm1392, %v1389, %v1391
      %v1397 = vsel %vm183, %v1379, 0
      %v1399 = vsel %vm187, %v1393, 0
      %v1401 = vsel %vm187, %v1394, 0
      %v1403 = vsel %vm187, %v1395, 0
      %1405 = vmatprep.subr.mxu0 %v1401
      %1406 = vmatpush1.msra.mxu0 %v1399
      %1407 = vmatprep.subr.mxu0 0.0
      %1408 = vmatpush1.msra.mxu0 0.0
      %1409 = vmatprep.subr.mxu0 0.0
      %1410 = vmatpush1.msra.mxu0 0.0
      %1411 = vmatprep.subr.mxu0 0.0
      %1412 = vmatpush1.msra.mxu0 0.0
      %1413 = vmatprep.subr.mxu0 0.0
      %1414 = vmatpush1.msra.mxu0 0.0
      %1415 = vmatprep.subr.mxu0 0.0
      %1416 = vmatpush1.msra.mxu0 0.0
      %1417 = vmatprep.subr.mxu0 0.0
      %1418 = vmatpush1.msra.mxu0 0.0
      %1419 = vmatprep.subr.mxu0 0.0
      %1420 = vmatpush1.msra.mxu0 0.0
      %1421 = vmatprep.subr.mxu0 0.0
      %1422 = vmatpush1.msra.mxu0 0.0
      %1423 = vmatprep.subr.mxu0 0.0
      %1424 = vmatpush1.msra.mxu0 0.0
      %1425 = vmatprep.subr.mxu0 0.0
      %1426 = vmatpush1.msra.mxu0 0.0
      %1427 = vmatprep.subr.mxu0 0.0
      %1428 = vmatpush1.msra.mxu0 0.0
      %1429 = vmatprep.subr.mxu0 0.0
      %1430 = vmatpush1.msra.mxu0 0.0
      %1431 = vmatprep.subr.mxu0 0.0
      %1432 = vmatpush1.msra.mxu0 0.0
      %1433 = vmatprep.subr.mxu0 0.0
      %1434 = vmatpush1.msra.mxu0 0.0
      %1435 = vmatprep.subr.mxu0 0.0
      %1436 = vmatpush1.msra.mxu0 0.0
      %1437 = vmatprep.subr.mxu0 0.0
      %1438 = vmatpush1.msra.mxu0 0.0
      %1439 = vmatprep.subr.mxu0 0.0
      %1440 = vmatpush1.msra.mxu0 0.0
      %1441 = vmatprep.subr.mxu0 0.0
      %1442 = vmatpush1.msra.mxu0 0.0
      %1443 = vmatprep.subr.mxu0 0.0
      %1444 = vmatpush1.msra.mxu0 0.0
      %1445 = vmatprep.subr.mxu0 0.0
      %1446 = vmatpush1.msra.mxu0 0.0
      %1447 = vmatprep.subr.mxu0 0.0
      %1448 = vmatpush1.msra.mxu0 0.0
      %1449 = vmatprep.subr.mxu0 0.0
      %1450 = vmatpush1.msra.mxu0 0.0
      %1451 = vmatprep.subr.mxu0 0.0
      %1452 = vmatpush1.msra.mxu0 0.0
      %1453 = vmatprep.subr.mxu0 0.0
      %1454 = vmatpush1.msra.mxu0 0.0
      %1455 = vmatprep.subr.mxu0 0.0
      %1456 = vmatpush1.msra.mxu0 0.0
      %1457 = vmatprep.subr.mxu0 0.0
      %1458 = vmatpush1.msra.mxu0 0.0
      %1459 = vmatprep.subr.mxu0 0.0
      %1460 = vmatpush1.msra.mxu0 0.0
      %1461 = vmatprep.subr.mxu0 0.0
      %1462 = vmatpush1.msra.mxu0 0.0
      %1463 = vmatprep.subr.mxu0 0.0
      %1464 = vmatpush1.msra.mxu0 0.0
      %1465 = vmatprep.subr.mxu0 0.0
      %1466 = vmatpush1.msra.mxu0 0.0
      %1467 = vmatprep.subr.mxu0 0.0
      %1468 = vmatpush1.msra.mxu0 0.0
      %1469 = vmatprep.mubr.f32.mxu0 0.0
      %1470 = vmatmul.mubr.f32.gmra.mrb[0].mxu0 %v1397
      %v1471 = vpop.f32.mrb[0].mxu0
      %v1472 = vadd.f32 0.0, %v1471
      %v1473 = vpop.f32.mrb[0].mxu0
      %v1474 = vadd.f32 0.0, %v1473
      %1475 = vdwg.mxu0
      %1476 = vmatprep.subr.mxu0 0.0
      %1477 = vmatpush1.msra.mxu0 %v1403
      %1478 = vmatprep.subr.mxu0 0.0
      %1479 = vmatpush1.msra.mxu0 0.0
      %1480 = vmatprep.subr.mxu0 0.0
      %1481 = vmatpush1.msra.mxu0 0.0
      %1482 = vmatprep.subr.mxu0 0.0
      %1483 = vmatpush1.msra.mxu0 0.0
      %1484 = vmatprep.subr.mxu0 0.0
      %1485 = vmatpush1.msra.mxu0 0.0
      %1486 = vmatprep.subr.mxu0 0.0
      %1487 = vmatpush1.msra.mxu0 0.0
      %1488 = vmatprep.subr.mxu0 0.0
      %1489 = vmatpush1.msra.mxu0 0.0
      %1490 = vmatprep.subr.mxu0 0.0
      %1491 = vmatpush1.msra.mxu0 0.0
      %1492 = vmatprep.subr.mxu0 0.0
      %1493 = vmatpush1.msra.mxu0 0.0
      %1494 = vmatprep.subr.mxu0 0.0
      %1495 = vmatpush1.msra.mxu0 0.0
      %1496 = vmatprep.subr.mxu0 0.0
      %1497 = vmatpush1.msra.mxu0 0.0
      %1498 = vmatprep.subr.mxu0 0.0
      %1499 = vmatpush1.msra.mxu0 0.0
      %1500 = vmatprep.subr.mxu0 0.0
      %1501 = vmatpush1.msra.mxu0 0.0
      %1502 = vmatprep.subr.mxu0 0.0
      %1503 = vmatpush1.msra.mxu0 0.0
      %1504 = vmatprep.subr.mxu0 0.0
      %1505 = vmatpush1.msra.mxu0 0.0
      %1506 = vmatprep.subr.mxu0 0.0
      %1507 = vmatpush1.msra.mxu0 0.0
      %1508 = vmatprep.subr.mxu0 0.0
      %1509 = vmatpush1.msra.mxu0 0.0
      %1510 = vmatprep.subr.mxu0 0.0
      %1511 = vmatpush1.msra.mxu0 0.0
      %1512 = vmatprep.subr.mxu0 0.0
      %1513 = vmatpush1.msra.mxu0 0.0
      %1514 = vmatprep.subr.mxu0 0.0
      %1515 = vmatpush1.msra.mxu0 0.0
      %1516 = vmatprep.subr.mxu0 0.0
      %1517 = vmatpush1.msra.mxu0 0.0
      %1518 = vmatprep.subr.mxu0 0.0
      %1519 = vmatpush1.msra.mxu0 0.0
      %1520 = vmatprep.subr.mxu0 0.0
      %1521 = vmatpush1.msra.mxu0 0.0
      %1522 = vmatprep.subr.mxu0 0.0
      %1523 = vmatpush1.msra.mxu0 0.0
      %1524 = vmatprep.subr.mxu0 0.0
      %1525 = vmatpush1.msra.mxu0 0.0
      %1526 = vmatprep.subr.mxu0 0.0
      %1527 = vmatpush1.msra.mxu0 0.0
      %1528 = vmatprep.subr.mxu0 0.0
      %1529 = vmatpush1.msra.mxu0 0.0
      %1530 = vmatprep.subr.mxu0 0.0
      %1531 = vmatpush1.msra.mxu0 0.0
      %1532 = vmatprep.subr.mxu0 0.0
      %1533 = vmatpush1.msra.mxu0 0.0
      %1534 = vmatprep.subr.mxu0 0.0
      %1535 = vmatpush1.msra.mxu0 0.0
      %1536 = vmatprep.subr.mxu0 0.0
      %1537 = vmatpush1.msra.mxu0 0.0
      %1538 = vmatprep.subr.mxu0 0.0
      %1539 = vmatpush1.msra.mxu0 0.0
      %1540 = vmatprep.mubr.f32.mxu0 0.0
      %1541 = vmatmul.mubr.f32.gmra.mrb[0].mxu0 %v1397
      %v1542 = vpop.f32.mrb[0].mxu0
      %v1543 = vadd.f32 0.0, %v1542
      %v1544 = vpop.f32.mrb[0].mxu0
      %1545 = vdwg.mxu0
      %v1546 = vadd.f32 %v1373, %v1472
      %v1547 = vadd.f32 %v1374, %v1474
      %v1548 = vadd.f32 %v1375, %v1543
      %v1549 = vld [vmem:[%s165] sm:$0xff]
      %v1550 = vld [vmem:[%s165 + $0x8] sm:$0xff]
      %s1551 = scalar_lea.vmem %s1, 64
      %v1552 = vld [vmem:[%s1551] sm:$0xff]
      %v1555 = vcombine.high %v1549, %v1549
      %v1556 = vcombine.high %v1550, %v1550
      %1557 = vrot.lane.b32.xlu0 %v1549, 90
      %v1558 = vpop.permute.xlu0 %1557
      %1559 = vrot.lane.b32.xlu0 %v1555, 90
      %v1560 = vpop.permute.xlu0 %1559
      %1561 = vrot.lane.b32.xlu0 %v1550, 90
      %v1562 = vpop.permute.xlu0 %1561
      %1563 = vrot.lane.b32.xlu0 %v1556, 90
      %v1564 = vpop.permute.xlu0 %1563
      %vm1565 = vcmask 736256
      %v1566 = vsel %vm1565, %v1558, %v1560
      %v1567 = vsel %vm1565, %v1560, %v1562
      %v1568 = vsel %vm1565, %v1562, %v1564
      %v1570 = vsel %vm183, %v1552, 0
      %v1572 = vsel %vm187, %v1566, 0
      %v1574 = vsel %vm187, %v1567, 0
      %v1576 = vsel %vm187, %v1568, 0
      %1578 = vmatprep.subr.mxu0 %v1574
      %1579 = vmatpush1.msra.mxu0 %v1572
      %1580 = vmatprep.subr.mxu0 0.0
      %1581 = vmatpush1.msra.mxu0 0.0
      %1582 = vmatprep.subr.mxu0 0.0
      %1583 = vmatpush1.msra.mxu0 0.0
      %1584 = vmatprep.subr.mxu0 0.0
      %1585 = vmatpush1.msra.mxu0 0.0
      %1586 = vmatprep.subr.mxu0 0.0
      %1587 = vmatpush1.msra.mxu0 0.0
      %1588 = vmatprep.subr.mxu0 0.0
      %1589 = vmatpush1.msra.mxu0 0.0
      %1590 = vmatprep.subr.mxu0 0.0
      %1591 = vmatpush1.msra.mxu0 0.0
      %1592 = vmatprep.subr.mxu0 0.0
      %1593 = vmatpush1.msra.mxu0 0.0
      %1594 = vmatprep.subr.mxu0 0.0
      %1595 = vmatpush1.msra.mxu0 0.0
      %1596 = vmatprep.subr.mxu0 0.0
      %1597 = vmatpush1.msra.mxu0 0.0
      %1598 = vmatprep.subr.mxu0 0.0
      %1599 = vmatpush1.msra.mxu0 0.0
      %1600 = vmatprep.subr.mxu0 0.0
      %1601 = vmatpush1.msra.mxu0 0.0
      %1602 = vmatprep.subr.mxu0 0.0
      %1603 = vmatpush1.msra.mxu0 0.0
      %1604 = vmatprep.subr.mxu0 0.0
      %1605 = vmatpush1.msra.mxu0 0.0
      %1606 = vmatprep.subr.mxu0 0.0
      %1607 = vmatpush1.msra.mxu0 0.0
      %1608 = vmatprep.subr.mxu0 0.0
      %1609 = vmatpush1.msra.mxu0 0.0
      %1610 = vmatprep.subr.mxu0 0.0
      %1611 = vmatpush1.msra.mxu0 0.0
      %1612 = vmatprep.subr.mxu0 0.0
      %1613 = vmatpush1.msra.mxu0 0.0
      %1614 = vmatprep.subr.mxu0 0.0
      %1615 = vmatpush1.msra.mxu0 0.0
      %1616 = vmatprep.subr.mxu0 0.0
      %1617 = vmatpush1.msra.mxu0 0.0
      %1618 = vmatprep.subr.mxu0 0.0
      %1619 = vmatpush1.msra.mxu0 0.0
      %1620 = vmatprep.subr.mxu0 0.0
      %1621 = vmatpush1.msra.mxu0 0.0
      %1622 = vmatprep.subr.mxu0 0.0
      %1623 = vmatpush1.msra.mxu0 0.0
      %1624 = vmatprep.subr.mxu0 0.0
      %1625 = vmatpush1.msra.mxu0 0.0
      %1626 = vmatprep.subr.mxu0 0.0
      %1627 = vmatpush1.msra.mxu0 0.0
      %1628 = vmatprep.subr.mxu0 0.0
      %1629 = vmatpush1.msra.mxu0 0.0
      %1630 = vmatprep.subr.mxu0 0.0
      %1631 = vmatpush1.msra.mxu0 0.0
      %1632 = vmatprep.subr.mxu0 0.0
      %1633 = vmatpush1.msra.mxu0 0.0
      %1634 = vmatprep.subr.mxu0 0.0
      %1635 = vmatpush1.msra.mxu0 0.0
      %1636 = vmatprep.subr.mxu0 0.0
      %1637 = vmatpush1.msra.mxu0 0.0
      %1638 = vmatprep.subr.mxu0 0.0
      %1639 = vmatpush1.msra.mxu0 0.0
      %1640 = vmatprep.subr.mxu0 0.0
      %1641 = vmatpush1.msra.mxu0 0.0
      %1642 = vmatprep.mubr.f32.mxu0 0.0
      %1643 = vmatmul.mubr.f32.gmra.mrb[0].mxu0 %v1570
      %v1644 = vpop.f32.mrb[0].mxu0
      %v1645 = vadd.f32 0.0, %v1644
      %v1646 = vpop.f32.mrb[0].mxu0
      %v1647 = vadd.f32 0.0, %v1646
      %1648 = vdwg.mxu0
      %1649 = vmatprep.subr.mxu0 0.0
      %1650 = vmatpush1.msra.mxu0 %v1576
      %1651 = vmatprep.subr.mxu0 0.0
      %1652 = vmatpush1.msra.mxu0 0.0
      %1653 = vmatprep.subr.mxu0 0.0
      %1654 = vmatpush1.msra.mxu0 0.0
      %1655 = vmatprep.subr.mxu0 0.0
      %1656 = vmatpush1.msra.mxu0 0.0
      %1657 = vmatprep.subr.mxu0 0.0
      %1658 = vmatpush1.msra.mxu0 0.0
      %1659 = vmatprep.subr.mxu0 0.0
      %1660 = vmatpush1.msra.mxu0 0.0
      %1661 = vmatprep.subr.mxu0 0.0
      %1662 = vmatpush1.msra.mxu0 0.0
      %1663 = vmatprep.subr.mxu0 0.0
      %1664 = vmatpush1.msra.mxu0 0.0
      %1665 = vmatprep.subr.mxu0 0.0
      %1666 = vmatpush1.msra.mxu0 0.0
      %1667 = vmatprep.subr.mxu0 0.0
      %1668 = vmatpush1.msra.mxu0 0.0
      %1669 = vmatprep.subr.mxu0 0.0
      %1670 = vmatpush1.msra.mxu0 0.0
      %1671 = vmatprep.subr.mxu0 0.0
      %1672 = vmatpush1.msra.mxu0 0.0
      %1673 = vmatprep.subr.mxu0 0.0
      %1674 = vmatpush1.msra.mxu0 0.0
      %1675 = vmatprep.subr.mxu0 0.0
      %1676 = vmatpush1.msra.mxu0 0.0
      %1677 = vmatprep.subr.mxu0 0.0
      %1678 = vmatpush1.msra.mxu0 0.0
      %1679 = vmatprep.subr.mxu0 0.0
      %1680 = vmatpush1.msra.mxu0 0.0
      %1681 = vmatprep.subr.mxu0 0.0
      %1682 = vmatpush1.msra.mxu0 0.0
      %1683 = vmatprep.subr.mxu0 0.0
      %1684 = vmatpush1.msra.mxu0 0.0
      %1685 = vmatprep.subr.mxu0 0.0
      %1686 = vmatpush1.msra.mxu0 0.0
      %1687 = vmatprep.subr.mxu0 0.0
      %1688 = vmatpush1.msra.mxu0 0.0
      %1689 = vmatprep.subr.mxu0 0.0
      %1690 = vmatpush1.msra.mxu0 0.0
      %1691 = vmatprep.subr.mxu0 0.0
      %1692 = vmatpush1.msra.mxu0 0.0
      %1693 = vmatprep.subr.mxu0 0.0
      %1694 = vmatpush1.msra.mxu0 0.0
      %1695 = vmatprep.subr.mxu0 0.0
      %1696 = vmatpush1.msra.mxu0 0.0
      %1697 = vmatprep.subr.mxu0 0.0
      %1698 = vmatpush1.msra.mxu0 0.0
      %1699 = vmatprep.subr.mxu0 0.0
      %1700 = vmatpush1.msra.mxu0 0.0
      %1701 = vmatprep.subr.mxu0 0.0
      %1702 = vmatpush1.msra.mxu0 0.0
      %1703 = vmatprep.subr.mxu0 0.0
      %1704 = vmatpush1.msra.mxu0 0.0
      %1705 = vmatprep.subr.mxu0 0.0
      %1706 = vmatpush1.msra.mxu0 0.0
      %1707 = vmatprep.subr.mxu0 0.0
      %1708 = vmatpush1.msra.mxu0 0.0
      %1709 = vmatprep.subr.mxu0 0.0
      %1710 = vmatpush1.msra.mxu0 0.0
      %1711 = vmatprep.subr.mxu0 0.0
      %1712 = vmatpush1.msra.mxu0 0.0
      %1713 = vmatprep.mubr.f32.mxu0 0.0
      %1714 = vmatmul.mubr.f32.gmra.mrb[0].mxu0 %v1570
      %v1715 = vpop.f32.mrb[0].mxu0
      %v1716 = vadd.f32 0.0, %v1715
      %v1717 = vpop.f32.mrb[0].mxu0
      %1718 = vdwg.mxu0
      %v1719 = vadd.f32 %v1546, %v1645
      %v1720 = vadd.f32 %v1547, %v1647
      %v1721 = vadd.f32 %v1548, %v1716
      %1722 = vst [vmem:[%s170] sm:$0xff] %v1719
      %1723 = vst [vmem:[%s170 + $0x8] sm:$0xff] %v1720
      %1724 = vst [vmem:[%s170 + $0x10] sm:$0xff] %v1721
      %p1725 = scmp.lt.s32.totalorder %s14, 1
      %s1726 = scalar_select %p1725, %s14, 1
      %s1727 = smul.addr %s1726, 3
      %s1728 = smul.addr %s1727, 8
      %s1729 = scalar_lea.vmem %s3, %s1728
      // Predicated region
      $region33: #{reflect_conv_forward.1} parent=31 // pred_check
        %p1730 = pneg %p100
      $region34: #{reflect_conv_forward.1} parent=31 // pred_check_branch
        %1732 = sbr.rel (%p1730) target = $region36
      $region35: #{reflect_conv_forward.1} parent=31 // pred_region
        _
      $region36: #{reflect_conv_forward.1} parent=31 // pred_fallthru
        _
    $region32: #{reflect_conv_forward.1} parent=5 // pred_fallthru
      _
    %p1733 = scmp.le.s32.totalorder 2, %s9
    // Predicated region
    $region37: #{reflect_conv_forward.1} parent=5 // pred_check
      %p1734 = pneg %p1733
    $region38: #{reflect_conv_forward.1} parent=5 // pred_check_branch
      %1736 = sbr.rel (%p1734) target = $region40
    $region39: #{reflect_conv_forward.1} parent=5 // pred_region
      %s1737 = ssub.s32 %s9, 2
      // Predicated region
      $region41: #{reflect_conv_forward.1} parent=39 // pred_check
        %p1738 = pneg %p106
      $region42: #{reflect_conv_forward.1} parent=39 // pred_check_branch
        %1740 = sbr.rel (%p1738) target = $region44
      $region43: #{reflect_conv_forward.1} parent=39 // pred_region
        %p1741 = scmp.lt.s32.totalorder %s15, 1
        %s1742 = scalar_select %p1741, %s15, 1
        %s1743 = smul.addr %s1742, 3
        %s1744 = smul.addr %s1743, 8
        %s1745 = scalar_lea.vmem %s3, %s1744
      $region44: #{reflect_conv_forward.1} parent=39 // pred_fallthru
        _
    $region40: #{reflect_conv_forward.1} parent=5 // pred_fallthru
      _
  $region6: #{reflect_conv_forward.1} parent=0 // loop_footer
    %s13 = sadd.s32 1, %s9
  $region7: #{reflect_conv_forward.1} parent=0 // loop_footer_branch
    %8 = sbr.rel target = $region3
  $region8: #{reflect_conv_forward.1} parent=0 // loop_exit
    _

</llo_original>
